<compile_context>
chip_gen: v7x
topology: tpu7x:2x2x1
jax: 0.10.0
libtpu: 0.0.40
codegen_flags: <defaults>
</compile_context>

<pallas_src>
import functools

import jax
import jax.numpy as jnp
import numpy as np
from jax.experimental import pallas as pl
from jax.experimental.pallas import tpu as pltpu


def _layernorm(x, gamma, beta, eps=1e-5):
    mean = jnp.mean(x, axis=-1, keepdims=True)
    var = jnp.mean((x - mean) ** 2, axis=-1, keepdims=True)
    return (x - mean) * jax.lax.rsqrt(var + eps) * gamma + beta


def _cross_transformer_kernel(xq_ref,
                              wq_ref, bq_ref,
                              wkv_ref, bkv_ref,
                              wo_ref, bo_ref,
                              g1_ref, be1_ref,
                              w1_ref, bf1_ref,
                              w2_ref, bf2_ref,
                              g2_ref, be2_ref,
                              o_ref,
                              ctx_ref,
                              *, n_head, seq, mm_dtype, approx_recip):
    """One grid step = one batch element.

    xq_ref : (2L, E)  rows = [x1[b] (L rows); x2[b] (L rows)]
    ctx_ref: (2L, E)  VMEM scratch holding the concatenated per-head contexts.
    """
    L = seq
    x = xq_ref[...].astype(jnp.float32)               # (2L, E)
    E = x.shape[-1]
    D = E // n_head

    # dif = x2 - x1, computed in-kernel (sublane slices of the resident slab).
    dif = x[L:, :] - x[:L, :]                          # (L, E)

    def mm(a, b):
        # MXU matmul with (optionally) bf16 operands and f32 accumulation.
        return jnp.dot(a.astype(mm_dtype), b.astype(mm_dtype),
                       preferred_element_type=jnp.float32)

    # Fused projections (softmax scale already folded into Wq / bq).
    q = mm(x, wq_ref[...]) + bq_ref[...]               # (2L, E)
    kv = mm(dif, wkv_ref[...]) + bkv_ref[...]          # (L, 2E)

    # Attention: both crosses (2L query rows) attend to the SAME L key/value
    # rows coming from `dif`.  Per head: scores contract the last dim of both
    # operands (no explicit k.T); the per-head context is written into the
    # ctx scratch so the out-projection is a single contraction over E.
    for h in range(n_head):                            # static, unrolled
        qh = q[:, h * D:(h + 1) * D]                   # (2L, D)
        kh = kv[:, h * D:(h + 1) * D]                  # (L, D)
        vh = kv[:, E + h * D:E + (h + 1) * D]          # (L, D)
        s = jax.lax.dot_general(qh.astype(mm_dtype), kh.astype(mm_dtype),
                                (((1,), (1,)), ((), ())),
                                preferred_element_type=jnp.float32)  # (2L, L)
        s = s - jnp.max(s, axis=-1, keepdims=True)
        e = jnp.exp(s)
        inv = pl.reciprocal(jnp.sum(e, axis=-1, keepdims=True),
                            approx=approx_recip)
        p = e * inv
        ctx_ref[:, h * D:(h + 1) * D] = mm(p, vh)      # (2L, D)

    # Single out-projection matmul per step (contraction over full E).
    attn = mm(ctx_ref[...], wo_ref[...]) + bo_ref[...]

    # residual + LayerNorm1   (dropout1 == identity)
    y = _layernorm(x + attn, g1_ref[...], be1_ref[...])
    # FFN: linear1 -> ReLU -> linear2   (dropout2 == identity)
    h1 = jnp.maximum(mm(y, w1_ref[...]) + bf1_ref[...], 0.0)
    ff = mm(h1, w2_ref[...]) + bf2_ref[...]
    # residual + LayerNorm2   (dropout3 == identity)
    o_ref[...] = _layernorm(y + ff, g2_ref[...], be2_ref[...]).astype(o_ref.dtype)


def cross_transformer(x1_lne, x2_lne, params, n_head=4, use_bf16=False):
    """Forward of CrossTransformer.  Inputs / outputs are (L, N, E).

    use_bf16: cast matmul operands (weights + activations at the MXU) to bf16
              with f32 accumulation.  Default False keeps exact-f32 matmuls so
              the strict 1e-4 correctness check holds.
    """
    x1 = jnp.transpose(x1_lne, (1, 0, 2)).astype(jnp.float32)   # (N, L, E)
    x2 = jnp.transpose(x2_lne, (1, 0, 2)).astype(jnp.float32)
    N, L, E = x1.shape
    F = 4 * E
    assert E % n_head == 0
    D = E // n_head
    # TODO(synk): pad the query rows if 2*L is not a multiple of 8 (sublane tiling).
    assert (2 * L) % 8 == 0, "2*L must be a multiple of 8 for the (8,128) tiling"
    scale = 1.0 / float(np.sqrt(D))
    w_dtype = jnp.bfloat16 if use_bf16 else jnp.float32

    # ---- weight prep (all projections become plain  x @ W  on the MXU) ----
    W_in = params["in_proj_weight"].astype(jnp.float32)
    b_in = params["in_proj_bias"].astype(jnp.float32)
    wq_t = (W_in[:E].T * scale).astype(w_dtype)      # fold 1/sqrt(D) into Q proj
    bq = (b_in[:E] * scale).reshape(1, E)
    wkv_t = jnp.concatenate([W_in[E:2 * E].T, W_in[2 * E:].T],
                            axis=1).astype(w_dtype)                    # (E, 2E)
    bkv = jnp.concatenate([b_in[E:2 * E], b_in[2 * E:]]).reshape(1, 2 * E)
    wo_t = params["out_proj_weight"].astype(jnp.float32).T.astype(w_dtype)
    bo = params["out_proj_bias"].astype(jnp.float32).reshape(1, E)
    g1 = params["norm1_weight"].astype(jnp.float32).reshape(1, E)
    be1 = params["norm1_bias"].astype(jnp.float32).reshape(1, E)
    w1_t = params["linear1_weight"].astype(jnp.float32).T.astype(w_dtype)  # (E, 4E)
    bf1 = params["linear1_bias"].astype(jnp.float32).reshape(1, F)
    w2_t = params["linear2_weight"].astype(jnp.float32).T.astype(w_dtype)  # (4E, E)
    bf2 = params["linear2_bias"].astype(jnp.float32).reshape(1, E)
    g2 = params["norm2_weight"].astype(jnp.float32).reshape(1, E)
    be2 = params["norm2_bias"].astype(jnp.float32).reshape(1, E)

    # Stacked query-row slab: per batch b the rows are [x1[b] (L); x2[b] (L)].
    xq = jnp.concatenate([x1, x2], axis=1).reshape(N * 2 * L, E)   # (N*2L, E)

    def const2d(shape):
        return pl.BlockSpec(shape, lambda b: (0, 0))

    out = pl.pallas_call(
        functools.partial(_cross_transformer_kernel, n_head=n_head, seq=L,
                          mm_dtype=w_dtype, approx_recip=use_bf16),
        out_shape=jax.ShapeDtypeStruct((N * 2 * L, E), jnp.float32),
        grid_spec=pltpu.PrefetchScalarGridSpec(
            num_scalar_prefetch=0,
            grid=(N,),                                            # one batch / step
            in_specs=[
                pl.BlockSpec((2 * L, E), lambda b: (b, 0)),       # xq rows
                const2d((E, E)), const2d((1, E)),                 # Wq, bq
                const2d((E, 2 * E)), const2d((1, 2 * E)),         # Wkv, bkv
                const2d((E, E)), const2d((1, E)),                 # Wo, bo
                const2d((1, E)), const2d((1, E)),                 # LN1
                const2d((E, F)), const2d((1, F)),                 # W1, b1
                const2d((F, E)), const2d((1, E)),                 # W2, b2
                const2d((1, E)), const2d((1, E)),                 # LN2
            ],
            out_specs=pl.BlockSpec((2 * L, E), lambda b: (b, 0)),
            scratch_shapes=[pltpu.VMEM((2 * L, E), jnp.float32)]),  # ctx slab
        compiler_params=pltpu.CompilerParams(
            dimension_semantics=("parallel",),
            # Safe on every generation (>= v5e's 16 MiB default, <= v7x's 64 MiB).
            vmem_limit_bytes=32 * 1024 * 1024),
    )(xq, wq_t, bq, wkv_t, bkv, wo_t, bo,
      g1, be1, w1_t, bf1, w2_t, bf2, g2, be2)

    out = out.reshape(N, 2 * L, E)
    o1 = jnp.transpose(out[:, :L, :], (1, 0, 2))    # (L, N, E)
    o2 = jnp.transpose(out[:, L:, :], (1, 0, 2))
    return o1, o2


# ----------------------- pure-JAX reference (for checking) -----------------------
def _ref_mha(q_in, kv_in, params, n_head):
    L, N, E = q_in.shape
    D = E // n_head
    W, b = params["in_proj_weight"], params["in_proj_bias"]
    q = q_in @ W[:E].T + b[:E]
    k = kv_in @ W[E:2 * E].T + b[E:2 * E]
    v = kv_in @ W[2 * E:].T + b[2 * E:]

    def split(x):  # (L, N, E) -> (N, H, L, D)
        return jnp.transpose(x.reshape(L, N, n_head, D), (1, 2, 0, 3))

    qh = split(q) / jnp.sqrt(jnp.float32(D))
    kh, vh = split(k), split(v)
    s = qh @ jnp.swapaxes(kh, -1, -2)
    p = jax.nn.softmax(s, axis=-1)
    ctx = p @ vh                                      # (N, H, L, D)
    ctx = jnp.transpose(ctx, (2, 0, 1, 3)).reshape(L, N, E)
    return ctx @ params["out_proj_weight"].T + params["out_proj_bias"]


def _ref_layernorm(x, g, b, eps=1e-5):
    m = jnp.mean(x, axis=-1, keepdims=True)
    v = jnp.mean((x - m) ** 2, axis=-1, keepdims=True)
    return (x - m) / jnp.sqrt(v + eps) * g + b


def _ref_cross(x, dif, params, n_head):
    a = _ref_mha(x, dif, params, n_head)
    y = _ref_layernorm(x + a, params["norm1_weight"], params["norm1_bias"])
    h = jnp.maximum(y @ params["linear1_weight"].T + params["linear1_bias"], 0.0)
    ff = h @ params["linear2_weight"].T + params["linear2_bias"]
    return _ref_layernorm(y + ff, params["norm2_weight"], params["norm2_bias"])


def reference(x1, x2, params, n_head=4):
    dif = x2 - x1
    return _ref_cross(x1, dif, params, n_head), _ref_cross(x2, dif, params, n_head)


# --------------------------------------- main ---------------------------------------
if __name__ == "__main__":
    L, N, E, H = 8, 2, 32, 4            # seq, batch, d_model, n_head (small sizes)
    key = jax.random.PRNGKey(0)
    ks = jax.random.split(key, 16)

    params = {
        "in_proj_weight":  0.1 * jax.random.normal(ks[0], (3 * E, E), jnp.float32),
        "in_proj_bias":    0.1 * jax.random.normal(ks[1], (3 * E,), jnp.float32),
        "out_proj_weight": 0.1 * jax.random.normal(ks[2], (E, E), jnp.float32),
        "out_proj_bias":   0.1 * jax.random.normal(ks[3], (E,), jnp.float32),
        "norm1_weight":    1.0 + 0.05 * jax.random.normal(ks[4], (E,), jnp.float32),
        "norm1_bias":      0.05 * jax.random.normal(ks[5], (E,), jnp.float32),
        "norm2_weight":    1.0 + 0.05 * jax.random.normal(ks[6], (E,), jnp.float32),
        "norm2_bias":      0.05 * jax.random.normal(ks[7], (E,), jnp.float32),
        "linear1_weight":  0.1 * jax.random.normal(ks[8], (4 * E, E), jnp.float32),
        "linear1_bias":    0.1 * jax.random.normal(ks[9], (4 * E,), jnp.float32),
        "linear2_weight":  0.1 * jax.random.normal(ks[10], (E, 4 * E), jnp.float32),
        "linear2_bias":    0.1 * jax.random.normal(ks[11], (E,), jnp.float32),
    }

    x1 = jax.random.normal(ks[12], (L, N, E), jnp.float32)
    x2 = jax.random.normal(ks[13], (L, N, E), jnp.float32)

    r1, r2 = reference(x1, x2, params, n_head=H)

    # Exact-f32 path: strict check against the reference.
    o1, o2 = cross_transformer(x1, x2, params, n_head=H, use_bf16=False)
    jax.block_until_ready((o1, o2))
    np.testing.assert_allclose(np.asarray(o1), np.asarray(r1), rtol=1e-4, atol=1e-4)
    np.testing.assert_allclose(np.asarray(o2), np.asarray(r2), rtol=1e-4, atol=1e-4)

    # bf16-operand perf path (MXU-native): loose sanity check only.
    b1, b2 = cross_transformer(x1, x2, params, n_head=H, use_bf16=True)
    jax.block_until_ready((b1, b2))
    np.testing.assert_allclose(np.asarray(b1), np.asarray(r1), rtol=2e-1, atol=2e-1)
    np.testing.assert_allclose(np.asarray(b2), np.asarray(r2), rtol=2e-1, atol=2e-1)

    print("KERNEL_OK")
</pallas_src>

<mosaic_0001>
module attributes {stable_mosaic.version = 11 : i64} {
  func.func @_cross_transformer_kernel(%arg0: i32, %arg1: memref<16x32xf32, #tpu.memory_space<vmem>>, %arg2: memref<32x32xf32, #tpu.memory_space<vmem>>, %arg3: memref<1x32xf32, #tpu.memory_space<vmem>>, %arg4: memref<32x64xf32, #tpu.memory_space<vmem>>, %arg5: memref<1x64xf32, #tpu.memory_space<vmem>>, %arg6: memref<32x32xf32, #tpu.memory_space<vmem>>, %arg7: memref<1x32xf32, #tpu.memory_space<vmem>>, %arg8: memref<1x32xf32, #tpu.memory_space<vmem>>, %arg9: memref<1x32xf32, #tpu.memory_space<vmem>>, %arg10: memref<32x128xf32, #tpu.memory_space<vmem>>, %arg11: memref<1x128xf32, #tpu.memory_space<vmem>>, %arg12: memref<128x32xf32, #tpu.memory_space<vmem>>, %arg13: memref<1x32xf32, #tpu.memory_space<vmem>>, %arg14: memref<1x32xf32, #tpu.memory_space<vmem>>, %arg15: memref<1x32xf32, #tpu.memory_space<vmem>>, %arg16: memref<16x32xf32, #tpu.memory_space<vmem>>, %arg17: memref<16x32xf32, #tpu.memory_space<vmem>>) attributes {dimension_semantics = [#tpu.dimension_semantics<parallel>], iteration_bounds = array<i64: 2>, scalar_prefetch = 0 : i64, scratch_operands = 1 : i64, tpu.core_type = #tpu.core_type<tc>, window_params = [{transform_indices = @transform_0, window_bounds = array<i64: 16, 32>}, {pipeline_mode = #tpu.pipeline_mode<synchronous>, transform_indices = @transform_1, window_bounds = array<i64: 32, 32>}, {pipeline_mode = #tpu.pipeline_mode<synchronous>, transform_indices = @transform_2, window_bounds = array<i64: 1, 32>}, {pipeline_mode = #tpu.pipeline_mode<synchronous>, transform_indices = @transform_3, window_bounds = array<i64: 32, 64>}, {pipeline_mode = #tpu.pipeline_mode<synchronous>, transform_indices = @transform_4, window_bounds = array<i64: 1, 64>}, {pipeline_mode = #tpu.pipeline_mode<synchronous>, transform_indices = @transform_5, window_bounds = array<i64: 32, 32>}, {pipeline_mode = #tpu.pipeline_mode<synchronous>, transform_indices = @transform_6, window_bounds = array<i64: 1, 32>}, {pipeline_mode = #tpu.pipeline_mode<synchronous>, transform_indices = @transform_7, window_bounds = array<i64: 1, 32>}, {pipeline_mode = #tpu.pipeline_mode<synchronous>, transform_indices = @transform_8, window_bounds = array<i64: 1, 32>}, {pipeline_mode = #tpu.pipeline_mode<synchronous>, transform_indices = @transform_9, window_bounds = array<i64: 32, 128>}, {pipeline_mode = #tpu.pipeline_mode<synchronous>, transform_indices = @transform_10, window_bounds = array<i64: 1, 128>}, {pipeline_mode = #tpu.pipeline_mode<synchronous>, transform_indices = @transform_11, window_bounds = array<i64: 128, 32>}, {pipeline_mode = #tpu.pipeline_mode<synchronous>, transform_indices = @transform_12, window_bounds = array<i64: 1, 32>}, {pipeline_mode = #tpu.pipeline_mode<synchronous>, transform_indices = @transform_13, window_bounds = array<i64: 1, 32>}, {pipeline_mode = #tpu.pipeline_mode<synchronous>, transform_indices = @transform_14, window_bounds = array<i64: 1, 32>}, {transform_indices = @transform_15, window_bounds = array<i64: 16, 32>}]} {
    %c0 = arith.constant 0 : index
    %c0_0 = arith.constant 0 : index
    %0 = vector.load %arg1[%c0, %c0_0] : memref<16x32xf32, #tpu.memory_space<vmem>>, vector<16x32xf32>
    %1 = vector.extract_strided_slice %0 {offsets = [8, 0], sizes = [8, 32], strides = [1, 1]} : vector<16x32xf32> to vector<8x32xf32>
    %2 = vector.extract_strided_slice %0 {offsets = [0, 0], sizes = [8, 32], strides = [1, 1]} : vector<16x32xf32> to vector<8x32xf32>
    %3 = arith.subf %1, %2 : vector<8x32xf32>
    %c0_1 = arith.constant 0 : index
    %c0_2 = arith.constant 0 : index
    %4 = vector.load %arg2[%c0_1, %c0_2] : memref<32x32xf32, #tpu.memory_space<vmem>>, vector<32x32xf32>
    %cst = arith.constant dense<0.000000e+00> : vector<16x32xf32>
    %5 = tpu.matmul %0, %4, %cst {dimension_numbers = #tpu.dot_dimension_numbers<[1], [0], [0], [1], [0, 0, 1, 1], [], []>} : vector<16x32xf32>, vector<32x32xf32>, vector<16x32xf32> -> vector<16x32xf32>
    %c0_3 = arith.constant 0 : index
    %c0_4 = arith.constant 0 : index
    %6 = vector.load %arg3[%c0_3, %c0_4] : memref<1x32xf32, #tpu.memory_space<vmem>>, vector<1x32xf32>
    %7 = vector.broadcast %6 : vector<1x32xf32> to vector<16x32xf32>
    %8 = arith.addf %5, %7 : vector<16x32xf32>
    %c0_5 = arith.constant 0 : index
    %c0_6 = arith.constant 0 : index
    %9 = vector.load %arg4[%c0_5, %c0_6] : memref<32x64xf32, #tpu.memory_space<vmem>>, vector<32x64xf32>
    %cst_7 = arith.constant dense<0.000000e+00> : vector<8x64xf32>
    %10 = tpu.matmul %3, %9, %cst_7 {dimension_numbers = #tpu.dot_dimension_numbers<[1], [0], [0], [1], [0, 0, 1, 1], [], []>} : vector<8x32xf32>, vector<32x64xf32>, vector<8x64xf32> -> vector<8x64xf32>
    %c0_8 = arith.constant 0 : index
    %c0_9 = arith.constant 0 : index
    %11 = vector.load %arg5[%c0_8, %c0_9] : memref<1x64xf32, #tpu.memory_space<vmem>>, vector<1x64xf32>
    %12 = vector.broadcast %11 : vector<1x64xf32> to vector<8x64xf32>
    %13 = arith.addf %10, %12 : vector<8x64xf32>
    %14 = vector.extract_strided_slice %8 {offsets = [0, 0], sizes = [16, 8], strides = [1, 1]} : vector<16x32xf32> to vector<16x8xf32>
    %15 = vector.extract_strided_slice %13 {offsets = [0, 0], sizes = [8, 8], strides = [1, 1]} : vector<8x64xf32> to vector<8x8xf32>
    %16 = vector.extract_strided_slice %13 {offsets = [0, 32], sizes = [8, 8], strides = [1, 1]} : vector<8x64xf32> to vector<8x8xf32>
    %cst_10 = arith.constant dense<0.000000e+00> : vector<16x8xf32>
    %17 = tpu.matmul %14, %15, %cst_10 {dimension_numbers = #tpu.dot_dimension_numbers<[1], [1], [0], [0], [0, 0, 1, 0], [], []>} : vector<16x8xf32>, vector<8x8xf32>, vector<16x8xf32> -> vector<16x8xf32>
    %cst_11 = arith.constant dense<0xFF800000> : vector<16xf32>
    %18 = vector.multi_reduction <maximumf>, %17, %cst_11 [1] : vector<16x8xf32> to vector<16xf32>
    %19 = vector.shape_cast %18 : vector<16xf32> to vector<16x1xf32>
    %20 = vector.broadcast %19 : vector<16x1xf32> to vector<16x8xf32>
    %21 = arith.subf %17, %20 : vector<16x8xf32>
    %22 = math.exp %21 : vector<16x8xf32>
    %cst_12 = arith.constant dense<0.000000e+00> : vector<16xf32>
    %23 = vector.multi_reduction <add>, %22, %cst_12 [1] : vector<16x8xf32> to vector<16xf32>
    %24 = vector.shape_cast %23 : vector<16xf32> to vector<16x1xf32>
    %25 = tpu.reciprocal %24 : vector<16x1xf32> -> vector<16x1xf32>
    %26 = vector.broadcast %25 : vector<16x1xf32> to vector<16x8xf32>
    %27 = arith.mulf %22, %26 : vector<16x8xf32>
    %cst_13 = arith.constant dense<0.000000e+00> : vector<16x8xf32>
    %28 = tpu.matmul %27, %16, %cst_13 {dimension_numbers = #tpu.dot_dimension_numbers<[1], [0], [0], [1], [0, 0, 1, 1], [], []>} : vector<16x8xf32>, vector<8x8xf32>, vector<16x8xf32> -> vector<16x8xf32>
    %c0_14 = arith.constant 0 : index
    %c0_15 = arith.constant 0 : index
    %29 = vector.load %arg17[%c0_14, %c0_15] : memref<16x32xf32, #tpu.memory_space<vmem>>, vector<16x8xf32>
    tpu.vector_store %arg17[%c0_14, %c0_15], %28 {strides = array<i32>} : memref<16x32xf32, #tpu.memory_space<vmem>>, vector<16x8xf32>,
    %30 = vector.extract_strided_slice %8 {offsets = [0, 8], sizes = [16, 8], strides = [1, 1]} : vector<16x32xf32> to vector<16x8xf32>
    %31 = vector.extract_strided_slice %13 {offsets = [0, 8], sizes = [8, 8], strides = [1, 1]} : vector<8x64xf32> to vector<8x8xf32>
    %32 = vector.extract_strided_slice %13 {offsets = [0, 40], sizes = [8, 8], strides = [1, 1]} : vector<8x64xf32> to vector<8x8xf32>
    %cst_16 = arith.constant dense<0.000000e+00> : vector<16x8xf32>
    %33 = tpu.matmul %30, %31, %cst_16 {dimension_numbers = #tpu.dot_dimension_numbers<[1], [1], [0], [0], [0, 0, 1, 0], [], []>} : vector<16x8xf32>, vector<8x8xf32>, vector<16x8xf32> -> vector<16x8xf32>
    %cst_17 = arith.constant dense<0xFF800000> : vector<16xf32>
    %34 = vector.multi_reduction <maximumf>, %33, %cst_17 [1] : vector<16x8xf32> to vector<16xf32>
    %35 = vector.shape_cast %34 : vector<16xf32> to vector<16x1xf32>
    %36 = vector.broadcast %35 : vector<16x1xf32> to vector<16x8xf32>
    %37 = arith.subf %33, %36 : vector<16x8xf32>
    %38 = math.exp %37 : vector<16x8xf32>
    %cst_18 = arith.constant dense<0.000000e+00> : vector<16xf32>
    %39 = vector.multi_reduction <add>, %38, %cst_18 [1] : vector<16x8xf32> to vector<16xf32>
    %40 = vector.shape_cast %39 : vector<16xf32> to vector<16x1xf32>
    %41 = tpu.reciprocal %40 : vector<16x1xf32> -> vector<16x1xf32>
    %42 = vector.broadcast %41 : vector<16x1xf32> to vector<16x8xf32>
    %43 = arith.mulf %38, %42 : vector<16x8xf32>
    %cst_19 = arith.constant dense<0.000000e+00> : vector<16x8xf32>
    %44 = tpu.matmul %43, %32, %cst_19 {dimension_numbers = #tpu.dot_dimension_numbers<[1], [0], [0], [1], [0, 0, 1, 1], [], []>} : vector<16x8xf32>, vector<8x8xf32>, vector<16x8xf32> -> vector<16x8xf32>
    %c0_20 = arith.constant 0 : index
    %c8 = arith.constant 8 : index
    %45 = vector.load %arg17[%c0_20, %c8] : memref<16x32xf32, #tpu.memory_space<vmem>>, vector<16x8xf32>
    tpu.vector_store %arg17[%c0_20, %c8], %44 {strides = array<i32>} : memref<16x32xf32, #tpu.memory_space<vmem>>, vector<16x8xf32>,
    %46 = vector.extract_strided_slice %8 {offsets = [0, 16], sizes = [16, 8], strides = [1, 1]} : vector<16x32xf32> to vector<16x8xf32>
    %47 = vector.extract_strided_slice %13 {offsets = [0, 16], sizes = [8, 8], strides = [1, 1]} : vector<8x64xf32> to vector<8x8xf32>
    %48 = vector.extract_strided_slice %13 {offsets = [0, 48], sizes = [8, 8], strides = [1, 1]} : vector<8x64xf32> to vector<8x8xf32>
    %cst_21 = arith.constant dense<0.000000e+00> : vector<16x8xf32>
    %49 = tpu.matmul %46, %47, %cst_21 {dimension_numbers = #tpu.dot_dimension_numbers<[1], [1], [0], [0], [0, 0, 1, 0], [], []>} : vector<16x8xf32>, vector<8x8xf32>, vector<16x8xf32> -> vector<16x8xf32>
    %cst_22 = arith.constant dense<0xFF800000> : vector<16xf32>
    %50 = vector.multi_reduction <maximumf>, %49, %cst_22 [1] : vector<16x8xf32> to vector<16xf32>
    %51 = vector.shape_cast %50 : vector<16xf32> to vector<16x1xf32>
    %52 = vector.broadcast %51 : vector<16x1xf32> to vector<16x8xf32>
    %53 = arith.subf %49, %52 : vector<16x8xf32>
    %54 = math.exp %53 : vector<16x8xf32>
    %cst_23 = arith.constant dense<0.000000e+00> : vector<16xf32>
    %55 = vector.multi_reduction <add>, %54, %cst_23 [1] : vector<16x8xf32> to vector<16xf32>
    %56 = vector.shape_cast %55 : vector<16xf32> to vector<16x1xf32>
    %57 = tpu.reciprocal %56 : vector<16x1xf32> -> vector<16x1xf32>
    %58 = vector.broadcast %57 : vector<16x1xf32> to vector<16x8xf32>
    %59 = arith.mulf %54, %58 : vector<16x8xf32>
    %cst_24 = arith.constant dense<0.000000e+00> : vector<16x8xf32>
    %60 = tpu.matmul %59, %48, %cst_24 {dimension_numbers = #tpu.dot_dimension_numbers<[1], [0], [0], [1], [0, 0, 1, 1], [], []>} : vector<16x8xf32>, vector<8x8xf32>, vector<16x8xf32> -> vector<16x8xf32>
    %c0_25 = arith.constant 0 : index
    %c16 = arith.constant 16 : index
    %61 = vector.load %arg17[%c0_25, %c16] : memref<16x32xf32, #tpu.memory_space<vmem>>, vector<16x8xf32>
    tpu.vector_store %arg17[%c0_25, %c16], %60 {strides = array<i32>} : memref<16x32xf32, #tpu.memory_space<vmem>>, vector<16x8xf32>,
    %62 = vector.extract_strided_slice %8 {offsets = [0, 24], sizes = [16, 8], strides = [1, 1]} : vector<16x32xf32> to vector<16x8xf32>
    %63 = vector.extract_strided_slice %13 {offsets = [0, 24], sizes = [8, 8], strides = [1, 1]} : vector<8x64xf32> to vector<8x8xf32>
    %64 = vector.extract_strided_slice %13 {offsets = [0, 56], sizes = [8, 8], strides = [1, 1]} : vector<8x64xf32> to vector<8x8xf32>
    %cst_26 = arith.constant dense<0.000000e+00> : vector<16x8xf32>
    %65 = tpu.matmul %62, %63, %cst_26 {dimension_numbers = #tpu.dot_dimension_numbers<[1], [1], [0], [0], [0, 0, 1, 0], [], []>} : vector<16x8xf32>, vector<8x8xf32>, vector<16x8xf32> -> vector<16x8xf32>
    %cst_27 = arith.constant dense<0xFF800000> : vector<16xf32>
    %66 = vector.multi_reduction <maximumf>, %65, %cst_27 [1] : vector<16x8xf32> to vector<16xf32>
    %67 = vector.shape_cast %66 : vector<16xf32> to vector<16x1xf32>
    %68 = vector.broadcast %67 : vector<16x1xf32> to vector<16x8xf32>
    %69 = arith.subf %65, %68 : vector<16x8xf32>
    %70 = math.exp %69 : vector<16x8xf32>
    %cst_28 = arith.constant dense<0.000000e+00> : vector<16xf32>
    %71 = vector.multi_reduction <add>, %70, %cst_28 [1] : vector<16x8xf32> to vector<16xf32>
    %72 = vector.shape_cast %71 : vector<16xf32> to vector<16x1xf32>
    %73 = tpu.reciprocal %72 : vector<16x1xf32> -> vector<16x1xf32>
    %74 = vector.broadcast %73 : vector<16x1xf32> to vector<16x8xf32>
    %75 = arith.mulf %70, %74 : vector<16x8xf32>
    %cst_29 = arith.constant dense<0.000000e+00> : vector<16x8xf32>
    %76 = tpu.matmul %75, %64, %cst_29 {dimension_numbers = #tpu.dot_dimension_numbers<[1], [0], [0], [1], [0, 0, 1, 1], [], []>} : vector<16x8xf32>, vector<8x8xf32>, vector<16x8xf32> -> vector<16x8xf32>
    %c0_30 = arith.constant 0 : index
    %c24 = arith.constant 24 : index
    %77 = vector.load %arg17[%c0_30, %c24] : memref<16x32xf32, #tpu.memory_space<vmem>>, vector<16x8xf32>
    tpu.vector_store %arg17[%c0_30, %c24], %76 {strides = array<i32>} : memref<16x32xf32, #tpu.memory_space<vmem>>, vector<16x8xf32>,
    %c0_31 = arith.constant 0 : index
    %c0_32 = arith.constant 0 : index
    %78 = vector.load %arg17[%c0_31, %c0_32] : memref<16x32xf32, #tpu.memory_space<vmem>>, vector<16x32xf32>
    %c0_33 = arith.constant 0 : index
    %c0_34 = arith.constant 0 : index
    %79 = vector.load %arg6[%c0_33, %c0_34] : memref<32x32xf32, #tpu.memory_space<vmem>>, vector<32x32xf32>
    %cst_35 = arith.constant dense<0.000000e+00> : vector<16x32xf32>
    %80 = tpu.matmul %78, %79, %cst_35 {dimension_numbers = #tpu.dot_dimension_numbers<[1], [0], [0], [1], [0, 0, 1, 1], [], []>} : vector<16x32xf32>, vector<32x32xf32>, vector<16x32xf32> -> vector<16x32xf32>
    %c0_36 = arith.constant 0 : index
    %c0_37 = arith.constant 0 : index
    %81 = vector.load %arg7[%c0_36, %c0_37] : memref<1x32xf32, #tpu.memory_space<vmem>>, vector<1x32xf32>
    %82 = vector.broadcast %81 : vector<1x32xf32> to vector<16x32xf32>
    %83 = arith.addf %80, %82 : vector<16x32xf32>
    %84 = arith.addf %0, %83 : vector<16x32xf32>
    %c0_38 = arith.constant 0 : index
    %c0_39 = arith.constant 0 : index
    %85 = vector.load %arg8[%c0_38, %c0_39] : memref<1x32xf32, #tpu.memory_space<vmem>>, vector<1x32xf32>
    %c0_40 = arith.constant 0 : index
    %c0_41 = arith.constant 0 : index
    %86 = vector.load %arg9[%c0_40, %c0_41] : memref<1x32xf32, #tpu.memory_space<vmem>>, vector<1x32xf32>
    %cst_42 = arith.constant dense<0.000000e+00> : vector<16xf32>
    %87 = vector.multi_reduction <add>, %84, %cst_42 [1] : vector<16x32xf32> to vector<16xf32>
    %88 = vector.shape_cast %87 : vector<16xf32> to vector<16x1xf32>
    %cst_43 = arith.constant 3.200000e+01 : f32
    %89 = vector.broadcast %cst_43 : f32 to vector<16x1xf32>
    %90 = arith.divf %88, %89 : vector<16x1xf32>
    %91 = vector.broadcast %90 : vector<16x1xf32> to vector<16x32xf32>
    %92 = arith.subf %84, %91 : vector<16x32xf32>
    %93 = arith.mulf %92, %92 : vector<16x32xf32>
    %cst_44 = arith.constant dense<0.000000e+00> : vector<16xf32>
    %94 = vector.multi_reduction <add>, %93, %cst_44 [1] : vector<16x32xf32> to vector<16xf32>
    %95 = vector.shape_cast %94 : vector<16xf32> to vector<16x1xf32>
    %cst_45 = arith.constant 3.200000e+01 : f32
    %96 = vector.broadcast %cst_45 : f32 to vector<16x1xf32>
    %97 = arith.divf %95, %96 : vector<16x1xf32>
    %98 = vector.broadcast %90 : vector<16x1xf32> to vector<16x32xf32>
    %99 = arith.subf %84, %98 : vector<16x32xf32>
    %cst_46 = arith.constant 9.99999974E-6 : f32
    %100 = vector.broadcast %cst_46 : f32 to vector<16x1xf32>
    %101 = arith.addf %97, %100 : vector<16x1xf32>
    %102 = math.rsqrt %101 : vector<16x1xf32>
    %103 = vector.broadcast %102 : vector<16x1xf32> to vector<16x32xf32>
    %104 = arith.mulf %99, %103 : vector<16x32xf32>
    %105 = vector.broadcast %85 : vector<1x32xf32> to vector<16x32xf32>
    %106 = arith.mulf %104, %105 : vector<16x32xf32>
    %107 = vector.broadcast %86 : vector<1x32xf32> to vector<16x32xf32>
    %108 = arith.addf %106, %107 : vector<16x32xf32>
    %c0_47 = arith.constant 0 : index
    %c0_48 = arith.constant 0 : index
    %109 = vector.load %arg10[%c0_47, %c0_48] : memref<32x128xf32, #tpu.memory_space<vmem>>, vector<32x128xf32>
    %cst_49 = arith.constant dense<0.000000e+00> : vector<16x128xf32>
    %110 = tpu.matmul %108, %109, %cst_49 {dimension_numbers = #tpu.dot_dimension_numbers<[1], [0], [0], [1], [0, 0, 1, 1], [], []>} : vector<16x32xf32>, vector<32x128xf32>, vector<16x128xf32> -> vector<16x128xf32>
    %c0_50 = arith.constant 0 : index
    %c0_51 = arith.constant 0 : index
    %111 = vector.load %arg11[%c0_50, %c0_51] : memref<1x128xf32, #tpu.memory_space<vmem>>, vector<1x128xf32>
    %112 = vector.broadcast %111 : vector<1x128xf32> to vector<16x128xf32>
    %113 = arith.addf %110, %112 : vector<16x128xf32>
    %cst_52 = arith.constant 0.000000e+00 : f32
    %114 = vector.broadcast %cst_52 : f32 to vector<16x128xf32>
    %115 = arith.maximumf %113, %114 : vector<16x128xf32>
    %c0_53 = arith.constant 0 : index
    %c0_54 = arith.constant 0 : index
    %116 = vector.load %arg12[%c0_53, %c0_54] : memref<128x32xf32, #tpu.memory_space<vmem>>, vector<128x32xf32>
    %cst_55 = arith.constant dense<0.000000e+00> : vector<16x32xf32>
    %117 = tpu.matmul %115, %116, %cst_55 {dimension_numbers = #tpu.dot_dimension_numbers<[1], [0], [0], [1], [0, 0, 1, 1], [], []>} : vector<16x128xf32>, vector<128x32xf32>, vector<16x32xf32> -> vector<16x32xf32>
    %c0_56 = arith.constant 0 : index
    %c0_57 = arith.constant 0 : index
    %118 = vector.load %arg13[%c0_56, %c0_57] : memref<1x32xf32, #tpu.memory_space<vmem>>, vector<1x32xf32>
    %119 = vector.broadcast %118 : vector<1x32xf32> to vector<16x32xf32>
    %120 = arith.addf %117, %119 : vector<16x32xf32>
    %121 = arith.addf %108, %120 : vector<16x32xf32>
    %c0_58 = arith.constant 0 : index
    %c0_59 = arith.constant 0 : index
    %122 = vector.load %arg14[%c0_58, %c0_59] : memref<1x32xf32, #tpu.memory_space<vmem>>, vector<1x32xf32>
    %c0_60 = arith.constant 0 : index
    %c0_61 = arith.constant 0 : index
    %123 = vector.load %arg15[%c0_60, %c0_61] : memref<1x32xf32, #tpu.memory_space<vmem>>, vector<1x32xf32>
    %cst_62 = arith.constant dense<0.000000e+00> : vector<16xf32>
    %124 = vector.multi_reduction <add>, %121, %cst_62 [1] : vector<16x32xf32> to vector<16xf32>
    %125 = vector.shape_cast %124 : vector<16xf32> to vector<16x1xf32>
    %cst_63 = arith.constant 3.200000e+01 : f32
    %126 = vector.broadcast %cst_63 : f32 to vector<16x1xf32>
    %127 = arith.divf %125, %126 : vector<16x1xf32>
    %128 = vector.broadcast %127 : vector<16x1xf32> to vector<16x32xf32>
    %129 = arith.subf %121, %128 : vector<16x32xf32>
    %130 = arith.mulf %129, %129 : vector<16x32xf32>
    %cst_64 = arith.constant dense<0.000000e+00> : vector<16xf32>
    %131 = vector.multi_reduction <add>, %130, %cst_64 [1] : vector<16x32xf32> to vector<16xf32>
    %132 = vector.shape_cast %131 : vector<16xf32> to vector<16x1xf32>
    %cst_65 = arith.constant 3.200000e+01 : f32
    %133 = vector.broadcast %cst_65 : f32 to vector<16x1xf32>
    %134 = arith.divf %132, %133 : vector<16x1xf32>
    %135 = vector.broadcast %127 : vector<16x1xf32> to vector<16x32xf32>
    %136 = arith.subf %121, %135 : vector<16x32xf32>
    %cst_66 = arith.constant 9.99999974E-6 : f32
    %137 = vector.broadcast %cst_66 : f32 to vector<16x1xf32>
    %138 = arith.addf %134, %137 : vector<16x1xf32>
    %139 = math.rsqrt %138 : vector<16x1xf32>
    %140 = vector.broadcast %139 : vector<16x1xf32> to vector<16x32xf32>
    %141 = arith.mulf %136, %140 : vector<16x32xf32>
    %142 = vector.broadcast %122 : vector<1x32xf32> to vector<16x32xf32>
    %143 = arith.mulf %141, %142 : vector<16x32xf32>
    %144 = vector.broadcast %123 : vector<1x32xf32> to vector<16x32xf32>
    %145 = arith.addf %143, %144 : vector<16x32xf32>
    %c0_67 = arith.constant 0 : index
    %c0_68 = arith.constant 0 : index
    %146 = vector.load %arg16[%c0_67, %c0_68] : memref<16x32xf32, #tpu.memory_space<vmem>>, vector<16x32xf32>
    tpu.vector_store %arg16[%c0_67, %c0_68], %145 {strides = array<i32>} : memref<16x32xf32, #tpu.memory_space<vmem>>, vector<16x32xf32>,
    return
  }
  func.func @transform_0(%arg0: i32) -> (i32, i32) {
    %c0_i32 = arith.constant 0 : i32
    %c0_i32_0 = arith.constant 0 : i32
    return %arg0, %c0_i32 : i32, i32
  }
  func.func @transform_1(%arg0: i32) -> (i32, i32) {
    %c0_i32 = arith.constant 0 : i32
    %c0_i32_0 = arith.constant 0 : i32
    %c0_i32_1 = arith.constant 0 : i32
    return %c0_i32, %c0_i32_0 : i32, i32
  }
  func.func @transform_2(%arg0: i32) -> (i32, i32) {
    %c0_i32 = arith.constant 0 : i32
    %c0_i32_0 = arith.constant 0 : i32
    %c0_i32_1 = arith.constant 0 : i32
    return %c0_i32, %c0_i32_0 : i32, i32
  }
  func.func @transform_3(%arg0: i32) -> (i32, i32) {
    %c0_i32 = arith.constant 0 : i32
    %c0_i32_0 = arith.constant 0 : i32
    %c0_i32_1 = arith.constant 0 : i32
    return %c0_i32, %c0_i32_0 : i32, i32
  }
  func.func @transform_4(%arg0: i32) -> (i32, i32) {
    %c0_i32 = arith.constant 0 : i32
    %c0_i32_0 = arith.constant 0 : i32
    %c0_i32_1 = arith.constant 0 : i32
    return %c0_i32, %c0_i32_0 : i32, i32
  }
  func.func @transform_5(%arg0: i32) -> (i32, i32) {
    %c0_i32 = arith.constant 0 : i32
    %c0_i32_0 = arith.constant 0 : i32
    %c0_i32_1 = arith.constant 0 : i32
    return %c0_i32, %c0_i32_0 : i32, i32
  }
  func.func @transform_6(%arg0: i32) -> (i32, i32) {
    %c0_i32 = arith.constant 0 : i32
    %c0_i32_0 = arith.constant 0 : i32
    %c0_i32_1 = arith.constant 0 : i32
    return %c0_i32, %c0_i32_0 : i32, i32
  }
  func.func @transform_7(%arg0: i32) -> (i32, i32) {
    %c0_i32 = arith.constant 0 : i32
    %c0_i32_0 = arith.constant 0 : i32
    %c0_i32_1 = arith.constant 0 : i32
    return %c0_i32, %c0_i32_0 : i32, i32
  }
  func.func @transform_8(%arg0: i32) -> (i32, i32) {
    %c0_i32 = arith.constant 0 : i32
    %c0_i32_0 = arith.constant 0 : i32
    %c0_i32_1 = arith.constant 0 : i32
    return %c0_i32, %c0_i32_0 : i32, i32
  }
  func.func @transform_9(%arg0: i32) -> (i32, i32) {
    %c0_i32 = arith.constant 0 : i32
    %c0_i32_0 = arith.constant 0 : i32
    %c0_i32_1 = arith.constant 0 : i32
    return %c0_i32, %c0_i32_0 : i32, i32
  }
  func.func @transform_10(%arg0: i32) -> (i32, i32) {
    %c0_i32 = arith.constant 0 : i32
    %c0_i32_0 = arith.constant 0 : i32
    %c0_i32_1 = arith.constant 0 : i32
    return %c0_i32, %c0_i32_0 : i32, i32
  }
  func.func @transform_11(%arg0: i32) -> (i32, i32) {
    %c0_i32 = arith.constant 0 : i32
    %c0_i32_0 = arith.constant 0 : i32
    %c0_i32_1 = arith.constant 0 : i32
    return %c0_i32, %c0_i32_0 : i32, i32
  }
  func.func @transform_12(%arg0: i32) -> (i32, i32) {
    %c0_i32 = arith.constant 0 : i32
    %c0_i32_0 = arith.constant 0 : i32
    %c0_i32_1 = arith.constant 0 : i32
    return %c0_i32, %c0_i32_0 : i32, i32
  }
  func.func @transform_13(%arg0: i32) -> (i32, i32) {
    %c0_i32 = arith.constant 0 : i32
    %c0_i32_0 = arith.constant 0 : i32
    %c0_i32_1 = arith.constant 0 : i32
    return %c0_i32, %c0_i32_0 : i32, i32
  }
  func.func @transform_14(%arg0: i32) -> (i32, i32) {
    %c0_i32 = arith.constant 0 : i32
    %c0_i32_0 = arith.constant 0 : i32
    %c0_i32_1 = arith.constant 0 : i32
    return %c0_i32, %c0_i32_0 : i32, i32
  }
  func.func @transform_15(%arg0: i32) -> (i32, i32) {
    %c0_i32 = arith.constant 0 : i32
    %c0_i32_0 = arith.constant 0 : i32
    return %arg0, %c0_i32 : i32, i32
  }
}

</mosaic_0001>

<llo_original>
// kernel: tpu_custom_call.1
$region0: #{tpu_custom_call.1}
  #allocation0 [shape = 'u32[]', space=smem, size = 0x4, offset = 0x4, fixed_abs, tag = 'smem constant byte address 0x4 - core index']
  #allocation1 [shape = 'u32[144,128]{1,0:T(1,128)}', space=vmem, size = 0x12000, scoped, tag = 'internal scratch']
  #allocation2 [shape = 'f32[16,32]{1,0:T(8,128)}', space=vmem, size = 0x2000, scoped, tag = 'scratch operand']
  %s0 = inlined_call_operand.vmem [shape: f32[32,32], index: 0, kind: input, shape index: {}]
  %s1 = inlined_call_operand.vmem [shape: f32[32,32], index: 1, kind: input, shape index: {}]
  %s2 = inlined_call_operand.vmem [shape: f32[1,32], index: 2, kind: input, shape index: {}]
  %s3 = inlined_call_operand.vmem [shape: f32[32,64], index: 3, kind: input, shape index: {}]
  %s4 = inlined_call_operand.vmem [shape: f32[1,64], index: 4, kind: input, shape index: {}]
  %s5 = inlined_call_operand.vmem [shape: f32[32,32], index: 5, kind: input, shape index: {}]
  %s6 = inlined_call_operand.vmem [shape: f32[1,32], index: 6, kind: input, shape index: {}]
  %s7 = inlined_call_operand.vmem [shape: f32[1,32], index: 7, kind: input, shape index: {}]
  %s8 = inlined_call_operand.vmem [shape: f32[1,32], index: 8, kind: input, shape index: {}]
  %s9 = inlined_call_operand.vmem [shape: f32[32,128], index: 9, kind: input, shape index: {}]
  %s10 = inlined_call_operand.vmem [shape: f32[1,128], index: 10, kind: input, shape index: {}]
  %s11 = inlined_call_operand.vmem [shape: f32[128,32], index: 11, kind: input, shape index: {}]
  %s12 = inlined_call_operand.vmem [shape: f32[1,32], index: 12, kind: input, shape index: {}]
  %s13 = inlined_call_operand.vmem [shape: f32[1,32], index: 13, kind: input, shape index: {}]
  %s14 = inlined_call_operand.vmem [shape: f32[1,32], index: 14, kind: input, shape index: {}]
  %s15 = inlined_call_operand.hbm [shape: f32[32,32], index: 15, kind: output, shape index: {}]
  %s16 = sld [smem:[#allocation0]]
  $region93: #{tpu_custom_call.1} parent=0
    _
  %s18 = ssub.s32 1, %s16
  %s19 = scalar_select 0, %s18, %s16
  $region1: #{tpu_custom_call.1} parent=0
    #allocation3 [shape = 'u8[16384]{0}', space=vmem, size = 0x4000, scoped, tag = 'output window, operand 0']
    #allocation4 [shape = 's32[2]{0}', space=sflag, size = 0x8, scoped, tag = 'scoped memory for tpu_custom_call.1']
    %20 = vsyncpa [#allocation4], 0
    %s21 = scalar_lea.sflag [#allocation4], 1
    %22 = vsyncpa %s21, 0
    loop: start=0, step=1, limit=4
    $region2: #{tpu_custom_call.1} parent=1 // loop_pre_header
      _
    $region3: #{tpu_custom_call.1} parent=1 // loop_header
      %s24 = sphi 0, %s28
      %p25 = scmp.ge.s32.totalorder %s24, 4
      %s34 = sphi 0, %s36
      %s37 = sphi 0, %s34
      %s38 = sphi 0, %s37
      %s54 = sphi 0, %s38
      %s58 = sphi 0, %s58
      %s60 = sphi 0, %s58
      %s61 = sphi 0, %s60
      %s75 = sphi 0, %s61
      %s79 = sphi 0, %s79
      %s81 = sphi 0, %s79
      %s82 = sphi 0, %s81
      %s96 = sphi 0, %s82
      %s100 = sphi 0, %s100
      %s102 = sphi 0, %s100
      %s103 = sphi 0, %s102
      %s117 = sphi 0, %s103
      %s121 = sphi 0, %s121
      %s123 = sphi 0, %s121
      %s124 = sphi 0, %s123
      %s138 = sphi 0, %s124
      %s142 = sphi 0, %s142
      %s144 = sphi 0, %s142
      %s145 = sphi 0, %s144
      %s159 = sphi 0, %s145
      %s163 = sphi 0, %s163
      %s165 = sphi 0, %s163
      %s166 = sphi 0, %s165
      %s180 = sphi 0, %s166
      %s184 = sphi 0, %s184
      %s186 = sphi 0, %s184
      %s187 = sphi 0, %s186
      %s201 = sphi 0, %s187
      %s205 = sphi 0, %s205
      %s207 = sphi 0, %s205
      %s208 = sphi 0, %s207
      %s222 = sphi 0, %s208
      %s226 = sphi 0, %s226
      %s228 = sphi 0, %s226
      %s229 = sphi 0, %s228
      %s243 = sphi 0, %s229
      %s247 = sphi 0, %s247
      %s249 = sphi 0, %s247
      %s250 = sphi 0, %s249
      %s264 = sphi 0, %s250
      %s268 = sphi 0, %s268
      %s270 = sphi 0, %s268
      %s271 = sphi 0, %s270
      %s285 = sphi 0, %s271
      %s289 = sphi 0, %s289
      %s291 = sphi 0, %s289
      %s292 = sphi 0, %s291
      %s306 = sphi 0, %s292
      %s310 = sphi 0, %s310
      %s312 = sphi 0, %s310
      %s313 = sphi 0, %s312
      %s327 = sphi 0, %s313
      %s331 = sphi 0, %s331
      %s333 = sphi 0, %s331
      %s334 = sphi 0, %s333
      %s348 = sphi 0, %s334
      %s354 = sphi 0, %s356
      %s357 = sphi 0, %s354
      %s358 = sphi 0, %s357
      %s374 = sphi 0, %s358
    $region4: #{tpu_custom_call.1} parent=1 // loop_header_branch
      %27 = sbr.rel (%p25) target = $region8
    $region5: #{tpu_custom_call.1} parent=1 // loop_body
      %s29 = ssub.s32 %s24, 1
      %s30 = ssub.s32 %s24, 2
      %s31 = sadd.s32 %s24, 1
      %s32 = ssub.s32 %s24, %s31
      %p33 = scmp.eq.s32.totalorder %s32, 0
      %s35 = sadd.s32 %s34, 1
      %s36 = scalar_select %p33, %s34, %s35
      %p39 = pneg %p33
      %p40 = scmp.eq.s32.totalorder %s24, 1
      %p41 = por %p39, %p40
      %p42 = scmp.ne.s32.totalorder %s34, %s37
      %p43 = scmp.eq.s32.totalorder %s24, 0
      %p44 = por %p42, %p43
      %p45 = scmp.ne.s32.totalorder %s34, %s37
      %p46 = scmp.eq.s32.totalorder %s29, 1
      %p47 = por %p45, %p46
      %p48 = scmp.ne.s32.totalorder %s37, %s38
      %p49 = scmp.eq.s32.totalorder %s29, 0
      %p50 = por %p48, %p49
      %p51 = scmp.ne.s32.totalorder %s37, %s38
      %p52 = scmp.eq.s32.totalorder %s30, 1
      %p53 = por %p51, %p52
      %p55 = scmp.ne.s32.totalorder %s38, %s54
      %p56 = scmp.eq.s32.totalorder %s30, 0
      %p57 = por %p55, %p56
      %s59 = sadd.s32 %s58, 1
      %p62 = scmp.eq.s32.totalorder %s24, 1
      %p63 = scmp.ne.s32.totalorder %s58, %s60
      %p64 = scmp.eq.s32.totalorder %s24, 0
      %p65 = por %p63, %p64
      %p66 = scmp.ne.s32.totalorder %s58, %s60
      %p67 = scmp.eq.s32.totalorder %s29, 1
      %p68 = por %p66, %p67
      %p69 = scmp.ne.s32.totalorder %s60, %s61
      %p70 = scmp.eq.s32.totalorder %s29, 0
      %p71 = por %p69, %p70
      %p72 = scmp.ne.s32.totalorder %s60, %s61
      %p73 = scmp.eq.s32.totalorder %s30, 1
      %p74 = por %p72, %p73
      %p76 = scmp.ne.s32.totalorder %s61, %s75
      %p77 = scmp.eq.s32.totalorder %s30, 0
      %p78 = por %p76, %p77
      %s80 = sadd.s32 %s79, 1
      %p83 = scmp.eq.s32.totalorder %s24, 1
      %p84 = scmp.ne.s32.totalorder %s79, %s81
      %p85 = scmp.eq.s32.totalorder %s24, 0
      %p86 = por %p84, %p85
      %p87 = scmp.ne.s32.totalorder %s79, %s81
      %p88 = scmp.eq.s32.totalorder %s29, 1
      %p89 = por %p87, %p88
      %p90 = scmp.ne.s32.totalorder %s81, %s82
      %p91 = scmp.eq.s32.totalorder %s29, 0
      %p92 = por %p90, %p91
      %p93 = scmp.ne.s32.totalorder %s81, %s82
      %p94 = scmp.eq.s32.totalorder %s30, 1
      %p95 = por %p93, %p94
      %p97 = scmp.ne.s32.totalorder %s82, %s96
      %p98 = scmp.eq.s32.totalorder %s30, 0
      %p99 = por %p97, %p98
      %s101 = sadd.s32 %s100, 1
      %p104 = scmp.eq.s32.totalorder %s24, 1
      %p105 = scmp.ne.s32.totalorder %s100, %s102
      %p106 = scmp.eq.s32.totalorder %s24, 0
      %p107 = por %p105, %p106
      %p108 = scmp.ne.s32.totalorder %s100, %s102
      %p109 = scmp.eq.s32.totalorder %s29, 1
      %p110 = por %p108, %p109
      %p111 = scmp.ne.s32.totalorder %s102, %s103
      %p112 = scmp.eq.s32.totalorder %s29, 0
      %p113 = por %p111, %p112
      %p114 = scmp.ne.s32.totalorder %s102, %s103
      %p115 = scmp.eq.s32.totalorder %s30, 1
      %p116 = por %p114, %p115
      %p118 = scmp.ne.s32.totalorder %s103, %s117
      %p119 = scmp.eq.s32.totalorder %s30, 0
      %p120 = por %p118, %p119
      %s122 = sadd.s32 %s121, 1
      %p125 = scmp.eq.s32.totalorder %s24, 1
      %p126 = scmp.ne.s32.totalorder %s121, %s123
      %p127 = scmp.eq.s32.totalorder %s24, 0
      %p128 = por %p126, %p127
      %p129 = scmp.ne.s32.totalorder %s121, %s123
      %p130 = scmp.eq.s32.totalorder %s29, 1
      %p131 = por %p129, %p130
      %p132 = scmp.ne.s32.totalorder %s123, %s124
      %p133 = scmp.eq.s32.totalorder %s29, 0
      %p134 = por %p132, %p133
      %p135 = scmp.ne.s32.totalorder %s123, %s124
      %p136 = scmp.eq.s32.totalorder %s30, 1
      %p137 = por %p135, %p136
      %p139 = scmp.ne.s32.totalorder %s124, %s138
      %p140 = scmp.eq.s32.totalorder %s30, 0
      %p141 = por %p139, %p140
      %s143 = sadd.s32 %s142, 1
      %p146 = scmp.eq.s32.totalorder %s24, 1
      %p147 = scmp.ne.s32.totalorder %s142, %s144
      %p148 = scmp.eq.s32.totalorder %s24, 0
      %p149 = por %p147, %p148
      %p150 = scmp.ne.s32.totalorder %s142, %s144
      %p151 = scmp.eq.s32.totalorder %s29, 1
      %p152 = por %p150, %p151
      %p153 = scmp.ne.s32.totalorder %s144, %s145
      %p154 = scmp.eq.s32.totalorder %s29, 0
      %p155 = por %p153, %p154
      %p156 = scmp.ne.s32.totalorder %s144, %s145
      %p157 = scmp.eq.s32.totalorder %s30, 1
      %p158 = por %p156, %p157
      %p160 = scmp.ne.s32.totalorder %s145, %s159
      %p161 = scmp.eq.s32.totalorder %s30, 0
      %p162 = por %p160, %p161
      %s164 = sadd.s32 %s163, 1
      %p167 = scmp.eq.s32.totalorder %s24, 1
      %p168 = scmp.ne.s32.totalorder %s163, %s165
      %p169 = scmp.eq.s32.totalorder %s24, 0
      %p170 = por %p168, %p169
      %p171 = scmp.ne.s32.totalorder %s163, %s165
      %p172 = scmp.eq.s32.totalorder %s29, 1
      %p173 = por %p171, %p172
      %p174 = scmp.ne.s32.totalorder %s165, %s166
      %p175 = scmp.eq.s32.totalorder %s29, 0
      %p176 = por %p174, %p175
      %p177 = scmp.ne.s32.totalorder %s165, %s166
      %p178 = scmp.eq.s32.totalorder %s30, 1
      %p179 = por %p177, %p178
      %p181 = scmp.ne.s32.totalorder %s166, %s180
      %p182 = scmp.eq.s32.totalorder %s30, 0
      %p183 = por %p181, %p182
      %s185 = sadd.s32 %s184, 1
      %p188 = scmp.eq.s32.totalorder %s24, 1
      %p189 = scmp.ne.s32.totalorder %s184, %s186
      %p190 = scmp.eq.s32.totalorder %s24, 0
      %p191 = por %p189, %p190
      %p192 = scmp.ne.s32.totalorder %s184, %s186
      %p193 = scmp.eq.s32.totalorder %s29, 1
      %p194 = por %p192, %p193
      %p195 = scmp.ne.s32.totalorder %s186, %s187
      %p196 = scmp.eq.s32.totalorder %s29, 0
      %p197 = por %p195, %p196
      %p198 = scmp.ne.s32.totalorder %s186, %s187
      %p199 = scmp.eq.s32.totalorder %s30, 1
      %p200 = por %p198, %p199
      %p202 = scmp.ne.s32.totalorder %s187, %s201
      %p203 = scmp.eq.s32.totalorder %s30, 0
      %p204 = por %p202, %p203
      %s206 = sadd.s32 %s205, 1
      %p209 = scmp.eq.s32.totalorder %s24, 1
      %p210 = scmp.ne.s32.totalorder %s205, %s207
      %p211 = scmp.eq.s32.totalorder %s24, 0
      %p212 = por %p210, %p211
      %p213 = scmp.ne.s32.totalorder %s205, %s207
      %p214 = scmp.eq.s32.totalorder %s29, 1
      %p215 = por %p213, %p214
      %p216 = scmp.ne.s32.totalorder %s207, %s208
      %p217 = scmp.eq.s32.totalorder %s29, 0
      %p218 = por %p216, %p217
      %p219 = scmp.ne.s32.totalorder %s207, %s208
      %p220 = scmp.eq.s32.totalorder %s30, 1
      %p221 = por %p219, %p220
      %p223 = scmp.ne.s32.totalorder %s208, %s222
      %p224 = scmp.eq.s32.totalorder %s30, 0
      %p225 = por %p223, %p224
      %s227 = sadd.s32 %s226, 1
      %p230 = scmp.eq.s32.totalorder %s24, 1
      %p231 = scmp.ne.s32.totalorder %s226, %s228
      %p232 = scmp.eq.s32.totalorder %s24, 0
      %p233 = por %p231, %p232
      %p234 = scmp.ne.s32.totalorder %s226, %s228
      %p235 = scmp.eq.s32.totalorder %s29, 1
      %p236 = por %p234, %p235
      %p237 = scmp.ne.s32.totalorder %s228, %s229
      %p238 = scmp.eq.s32.totalorder %s29, 0
      %p239 = por %p237, %p238
      %p240 = scmp.ne.s32.totalorder %s228, %s229
      %p241 = scmp.eq.s32.totalorder %s30, 1
      %p242 = por %p240, %p241
      %p244 = scmp.ne.s32.totalorder %s229, %s243
      %p245 = scmp.eq.s32.totalorder %s30, 0
      %p246 = por %p244, %p245
      %s248 = sadd.s32 %s247, 1
      %p251 = scmp.eq.s32.totalorder %s24, 1
      %p252 = scmp.ne.s32.totalorder %s247, %s249
      %p253 = scmp.eq.s32.totalorder %s24, 0
      %p254 = por %p252, %p253
      %p255 = scmp.ne.s32.totalorder %s247, %s249
      %p256 = scmp.eq.s32.totalorder %s29, 1
      %p257 = por %p255, %p256
      %p258 = scmp.ne.s32.totalorder %s249, %s250
      %p259 = scmp.eq.s32.totalorder %s29, 0
      %p260 = por %p258, %p259
      %p261 = scmp.ne.s32.totalorder %s249, %s250
      %p262 = scmp.eq.s32.totalorder %s30, 1
      %p263 = por %p261, %p262
      %p265 = scmp.ne.s32.totalorder %s250, %s264
      %p266 = scmp.eq.s32.totalorder %s30, 0
      %p267 = por %p265, %p266
      %s269 = sadd.s32 %s268, 1
      %p272 = scmp.eq.s32.totalorder %s24, 1
      %p273 = scmp.ne.s32.totalorder %s268, %s270
      %p274 = scmp.eq.s32.totalorder %s24, 0
      %p275 = por %p273, %p274
      %p276 = scmp.ne.s32.totalorder %s268, %s270
      %p277 = scmp.eq.s32.totalorder %s29, 1
      %p278 = por %p276, %p277
      %p279 = scmp.ne.s32.totalorder %s270, %s271
      %p280 = scmp.eq.s32.totalorder %s29, 0
      %p281 = por %p279, %p280
      %p282 = scmp.ne.s32.totalorder %s270, %s271
      %p283 = scmp.eq.s32.totalorder %s30, 1
      %p284 = por %p282, %p283
      %p286 = scmp.ne.s32.totalorder %s271, %s285
      %p287 = scmp.eq.s32.totalorder %s30, 0
      %p288 = por %p286, %p287
      %s290 = sadd.s32 %s289, 1
      %p293 = scmp.eq.s32.totalorder %s24, 1
      %p294 = scmp.ne.s32.totalorder %s289, %s291
      %p295 = scmp.eq.s32.totalorder %s24, 0
      %p296 = por %p294, %p295
      %p297 = scmp.ne.s32.totalorder %s289, %s291
      %p298 = scmp.eq.s32.totalorder %s29, 1
      %p299 = por %p297, %p298
      %p300 = scmp.ne.s32.totalorder %s291, %s292
      %p301 = scmp.eq.s32.totalorder %s29, 0
      %p302 = por %p300, %p301
      %p303 = scmp.ne.s32.totalorder %s291, %s292
      %p304 = scmp.eq.s32.totalorder %s30, 1
      %p305 = por %p303, %p304
      %p307 = scmp.ne.s32.totalorder %s292, %s306
      %p308 = scmp.eq.s32.totalorder %s30, 0
      %p309 = por %p307, %p308
      %s311 = sadd.s32 %s310, 1
      %p314 = scmp.eq.s32.totalorder %s24, 1
      %p315 = scmp.ne.s32.totalorder %s310, %s312
      %p316 = scmp.eq.s32.totalorder %s24, 0
      %p317 = por %p315, %p316
      %p318 = scmp.ne.s32.totalorder %s310, %s312
      %p319 = scmp.eq.s32.totalorder %s29, 1
      %p320 = por %p318, %p319
      %p321 = scmp.ne.s32.totalorder %s312, %s313
      %p322 = scmp.eq.s32.totalorder %s29, 0
      %p323 = por %p321, %p322
      %p324 = scmp.ne.s32.totalorder %s312, %s313
      %p325 = scmp.eq.s32.totalorder %s30, 1
      %p326 = por %p324, %p325
      %p328 = scmp.ne.s32.totalorder %s313, %s327
      %p329 = scmp.eq.s32.totalorder %s30, 0
      %p330 = por %p328, %p329
      %s332 = sadd.s32 %s331, 1
      %p335 = scmp.eq.s32.totalorder %s24, 1
      %p336 = scmp.ne.s32.totalorder %s331, %s333
      %p337 = scmp.eq.s32.totalorder %s24, 0
      %p338 = por %p336, %p337
      %p339 = scmp.ne.s32.totalorder %s331, %s333
      %p340 = scmp.eq.s32.totalorder %s29, 1
      %p341 = por %p339, %p340
      %p342 = scmp.ne.s32.totalorder %s333, %s334
      %p343 = scmp.eq.s32.totalorder %s29, 0
      %p344 = por %p342, %p343
      %p345 = scmp.ne.s32.totalorder %s333, %s334
      %p346 = scmp.eq.s32.totalorder %s30, 1
      %p347 = por %p345, %p346
      %p349 = scmp.ne.s32.totalorder %s334, %s348
      %p350 = scmp.eq.s32.totalorder %s30, 0
      %p351 = por %p349, %p350
      %s352 = ssub.s32 %s24, %s31
      %p353 = scmp.eq.s32.totalorder %s352, 0
      %s355 = sadd.s32 %s354, 1
      %s356 = scalar_select %p353, %s354, %s355
      %p359 = pneg %p353
      %p360 = scmp.eq.s32.totalorder %s24, 1
      %p361 = por %p359, %p360
      %p362 = scmp.ne.s32.totalorder %s354, %s357
      %p363 = scmp.eq.s32.totalorder %s24, 0
      %p364 = por %p362, %p363
      %p365 = scmp.ne.s32.totalorder %s354, %s357
      %p366 = scmp.eq.s32.totalorder %s29, 1
      %p367 = por %p365, %p366
      %p368 = scmp.ne.s32.totalorder %s357, %s358
      %p369 = scmp.eq.s32.totalorder %s29, 0
      %p370 = por %p368, %p369
      %p371 = scmp.ne.s32.totalorder %s357, %s358
      %p372 = scmp.eq.s32.totalorder %s30, 1
      %p373 = por %p371, %p372
      %p375 = scmp.ne.s32.totalorder %s358, %s374
      %p376 = scmp.eq.s32.totalorder %s30, 0
      %p377 = por %p375, %p376
      %p378 = scmp.le.s32.totalorder 1, %s24
      %p379 = scmp.lt.s32.totalorder %s24, 3
      %p380 = pnand %p378, %p379
      %p381 = pneg %p380
      // Predicated region
      $region9: #{tpu_custom_call.1} parent=5 // pred_check
        _
      $region10: #{tpu_custom_call.1} parent=5 // pred_check_branch
        %383 = sbr.rel (%p380) target = $region12
      $region11: #{tpu_custom_call.1} parent=5 // pred_region
        %s384 = ssub.s32 %s24, 1
        // Predicated region
        $region13: #{tpu_custom_call.1} parent=11 // pred_check
          %p385 = pneg %p71
        $region14: #{tpu_custom_call.1} parent=11 // pred_check_branch
          %387 = sbr.rel (%p385) target = $region16
        $region15: #{tpu_custom_call.1} parent=11 // pred_region
          _
        $region16: #{tpu_custom_call.1} parent=11 // pred_fallthru
          _
        // Predicated region
        $region17: #{tpu_custom_call.1} parent=11 // pred_check
          %p388 = pneg %p92
        $region18: #{tpu_custom_call.1} parent=11 // pred_check_branch
          %390 = sbr.rel (%p388) target = $region20
        $region19: #{tpu_custom_call.1} parent=11 // pred_region
          _
        $region20: #{tpu_custom_call.1} parent=11 // pred_fallthru
          _
        // Predicated region
        $region21: #{tpu_custom_call.1} parent=11 // pred_check
          %p391 = pneg %p113
        $region22: #{tpu_custom_call.1} parent=11 // pred_check_branch
          %393 = sbr.rel (%p391) target = $region24
        $region23: #{tpu_custom_call.1} parent=11 // pred_region
          _
        $region24: #{tpu_custom_call.1} parent=11 // pred_fallthru
          _
        // Predicated region
        $region25: #{tpu_custom_call.1} parent=11 // pred_check
          %p394 = pneg %p134
        $region26: #{tpu_custom_call.1} parent=11 // pred_check_branch
          %396 = sbr.rel (%p394) target = $region28
        $region27: #{tpu_custom_call.1} parent=11 // pred_region
          _
        $region28: #{tpu_custom_call.1} parent=11 // pred_fallthru
          _
        // Predicated region
        $region29: #{tpu_custom_call.1} parent=11 // pred_check
          %p397 = pneg %p155
        $region30: #{tpu_custom_call.1} parent=11 // pred_check_branch
          %399 = sbr.rel (%p397) target = $region32
        $region31: #{tpu_custom_call.1} parent=11 // pred_region
          _
        $region32: #{tpu_custom_call.1} parent=11 // pred_fallthru
          _
        // Predicated region
        $region33: #{tpu_custom_call.1} parent=11 // pred_check
          %p400 = pneg %p176
        $region34: #{tpu_custom_call.1} parent=11 // pred_check_branch
          %402 = sbr.rel (%p400) target = $region36
        $region35: #{tpu_custom_call.1} parent=11 // pred_region
          _
        $region36: #{tpu_custom_call.1} parent=11 // pred_fallthru
          _
        // Predicated region
        $region37: #{tpu_custom_call.1} parent=11 // pred_check
          %p403 = pneg %p197
        $region38: #{tpu_custom_call.1} parent=11 // pred_check_branch
          %405 = sbr.rel (%p403) target = $region40
        $region39: #{tpu_custom_call.1} parent=11 // pred_region
          _
        $region40: #{tpu_custom_call.1} parent=11 // pred_fallthru
          _
        // Predicated region
        $region41: #{tpu_custom_call.1} parent=11 // pred_check
          %p406 = pneg %p218
        $region42: #{tpu_custom_call.1} parent=11 // pred_check_branch
          %408 = sbr.rel (%p406) target = $region44
        $region43: #{tpu_custom_call.1} parent=11 // pred_region
          _
        $region44: #{tpu_custom_call.1} parent=11 // pred_fallthru
          _
        // Predicated region
        $region45: #{tpu_custom_call.1} parent=11 // pred_check
          %p409 = pneg %p239
        $region46: #{tpu_custom_call.1} parent=11 // pred_check_branch
          %411 = sbr.rel (%p409) target = $region48
        $region47: #{tpu_custom_call.1} parent=11 // pred_region
          _
        $region48: #{tpu_custom_call.1} parent=11 // pred_fallthru
          _
        // Predicated region
        $region49: #{tpu_custom_call.1} parent=11 // pred_check
          %p412 = pneg %p260
        $region50: #{tpu_custom_call.1} parent=11 // pred_check_branch
          %414 = sbr.rel (%p412) target = $region52
        $region51: #{tpu_custom_call.1} parent=11 // pred_region
          _
        $region52: #{tpu_custom_call.1} parent=11 // pred_fallthru
          _
        // Predicated region
        $region53: #{tpu_custom_call.1} parent=11 // pred_check
          %p415 = pneg %p281
        $region54: #{tpu_custom_call.1} parent=11 // pred_check_branch
          %417 = sbr.rel (%p415) target = $region56
        $region55: #{tpu_custom_call.1} parent=11 // pred_region
          _
        $region56: #{tpu_custom_call.1} parent=11 // pred_fallthru
          _
        // Predicated region
        $region57: #{tpu_custom_call.1} parent=11 // pred_check
          %p418 = pneg %p302
        $region58: #{tpu_custom_call.1} parent=11 // pred_check_branch
          %420 = sbr.rel (%p418) target = $region60
        $region59: #{tpu_custom_call.1} parent=11 // pred_region
          _
        $region60: #{tpu_custom_call.1} parent=11 // pred_fallthru
          _
        // Predicated region
        $region61: #{tpu_custom_call.1} parent=11 // pred_check
          %p421 = pneg %p323
        $region62: #{tpu_custom_call.1} parent=11 // pred_check_branch
          %423 = sbr.rel (%p421) target = $region64
        $region63: #{tpu_custom_call.1} parent=11 // pred_region
          _
        $region64: #{tpu_custom_call.1} parent=11 // pred_fallthru
          _
        // Predicated region
        $region65: #{tpu_custom_call.1} parent=11 // pred_check
          %p424 = pneg %p344
        $region66: #{tpu_custom_call.1} parent=11 // pred_check_branch
          %426 = sbr.rel (%p424) target = $region68
        $region67: #{tpu_custom_call.1} parent=11 // pred_region
          _
        $region68: #{tpu_custom_call.1} parent=11 // pred_fallthru
          _
      $region12: #{tpu_custom_call.1} parent=5 // pred_fallthru
        _
      %p427 = scmp.lt.s32.totalorder %s24, 2
      // Predicated region
      $region69: #{tpu_custom_call.1} parent=5 // pred_check
        %p428 = pneg %p427
      $region70: #{tpu_custom_call.1} parent=5 // pred_check_branch
        %430 = sbr.rel (%p428) target = $region72
      $region71: #{tpu_custom_call.1} parent=5 // pred_region
        // Predicated region
        $region73: #{tpu_custom_call.1} parent=71 // pred_check
          %p431 = pneg %p44
        $region74: #{tpu_custom_call.1} parent=71 // pred_check_branch
          %433 = sbr.rel (%p431) target = $region76
        $region75: #{tpu_custom_call.1} parent=71 // pred_region
          %s434 = smul.u32 2, %s24
          %p435 = scmp.lt.s32.totalorder %s434, 3
          %s436 = scalar_select %p435, %s434, 3
          %s437 = smul.addr %s436, 8
          %s438 = scalar_lea.vmem %s0, %s437
          %s439 = smul.u32 2, %s24
        $region76: #{tpu_custom_call.1} parent=71 // pred_fallthru
          _
      $region72: #{tpu_custom_call.1} parent=5 // pred_fallthru
        _
      %p440 = scmp.le.s32.totalorder 1, %s24
      %p441 = scmp.lt.s32.totalorder %s24, 3
      %p442 = pnand %p440, %p441
      %p443 = pneg %p442
      // Predicated region
      $region77: #{tpu_custom_call.1} parent=5 // pred_check
        _
      $region78: #{tpu_custom_call.1} parent=5 // pred_check_branch
        %445 = sbr.rel (%p442) target = $region80
      $region79: #{tpu_custom_call.1} parent=5 // pred_region
        %s446 = ssub.s32 %s24, 1
        %s447 = smul.u32 2, %s29
        %p448 = scmp.lt.s32.totalorder %s447, 3
        %s449 = scalar_select %p448, %s447, 3
        %s450 = smul.addr %s449, 8
        %s451 = scalar_lea.vmem %s0, %s450
        %p452 = pneg %p50
        %p453 = pneg %p47
        %p454 = pneg %p71
        %p455 = pneg %p68
        %p456 = pneg %p92
        %p457 = pneg %p89
        %p458 = pneg %p113
        %p459 = pneg %p110
        %p460 = pneg %p134
        %p461 = pneg %p131
        %p462 = pneg %p155
        %p463 = pneg %p152
        %p464 = pneg %p176
        %p465 = pneg %p173
        %p466 = pneg %p197
        %p467 = pneg %p194
        %p468 = pneg %p218
        %p469 = pneg %p215
        %p470 = pneg %p239
        %p471 = pneg %p236
        %p472 = pneg %p260
        %p473 = pneg %p257
        %p474 = pneg %p281
        %p475 = pneg %p278
        %p476 = pneg %p302
        %p477 = pneg %p299
        %p478 = pneg %p323
        %p479 = pneg %p320
        %p480 = pneg %p344
        %p481 = pneg %p341
        %p482 = pneg %p370
        %p483 = pneg %p367
        %s484 = sand.u32 %s357, 1
        %s485 = scalar_lea.sflag [#allocation4], %s484
        %s486 = sand.u32 %s357, 1
        %s487 = smul.addr %s486, 16
        %s488 = scalar_lea.vmem [#allocation3], %s487
        %s489 = smul.u32 2, %s29
        %p490 = scmp.lt.s32.totalorder %s489, 3
        %s491 = scalar_select %p490, %s489, 3
        %s492 = smul.addr %s491, 8
        %s493 = scalar_lea.vmem %s0, %s492
        %s494 = smul.u32 2, %s29
        %s495 = smul.u32 2, %s29
        %v496 = vld [vmem:[%s493] sm:$0xff]
        %v497 = vld [vmem:[%s493 + $0x8] sm:$0xff]
        %v498 = vsub.f32 %v497, %v496
        %v499 = vld [vmem:[%s1] sm:$0xff]
        %v500 = vld [vmem:[%s1 + $0x8] sm:$0xff]
        %v501 = vld [vmem:[%s1 + $0x10] sm:$0xff]
        %v502 = vld [vmem:[%s1 + $0x18] sm:$0xff]
        %v503 = vld [vmem:[%s2] sm:$0x1]
        %v505 = vlaneseq
        %v506 = vshrl.u32 %v505, 7
        %v507 = vsub.s32 0, %v506
        %v508 = vrot.slane %v503, %v507
        %vm510 = vcmask 261120
        %v512 = vsel %vm510, %v496, 0
        %v515 = vsel %vm510, %v497, 0
        %517 = vmatprep.subr.mxu0 0.0
        %518 = vmatpush1.msra.mxu0 %v499
        %519 = vmatprep.subr.mxu0 0.0
        %520 = vmatpush1.msra.mxu0 %v500
        %521 = vmatprep.subr.mxu0 0.0
        %522 = vmatpush1.msra.mxu0 %v501
        %523 = vmatprep.subr.mxu0 0.0
        %524 = vmatpush1.msra.mxu0 %v502
        %525 = vmatprep.subr.mxu0 0.0
        %526 = vmatpush1.msra.mxu0 0.0
        %527 = vmatprep.subr.mxu0 0.0
        %528 = vmatpush1.msra.mxu0 0.0
        %529 = vmatprep.subr.mxu0 0.0
        %530 = vmatpush1.msra.mxu0 0.0
        %531 = vmatprep.subr.mxu0 0.0
        %532 = vmatpush1.msra.mxu0 0.0
        %533 = vmatprep.subr.mxu0 0.0
        %534 = vmatpush1.msra.mxu0 0.0
        %535 = vmatprep.subr.mxu0 0.0
        %536 = vmatpush1.msra.mxu0 0.0
        %537 = vmatprep.subr.mxu0 0.0
        %538 = vmatpush1.msra.mxu0 0.0
        %539 = vmatprep.subr.mxu0 0.0
        %540 = vmatpush1.msra.mxu0 0.0
        %541 = vmatprep.subr.mxu0 0.0
        %542 = vmatpush1.msra.mxu0 0.0
        %543 = vmatprep.subr.mxu0 0.0
        %544 = vmatpush1.msra.mxu0 0.0
        %545 = vmatprep.subr.mxu0 0.0
        %546 = vmatpush1.msra.mxu0 0.0
        %547 = vmatprep.subr.mxu0 0.0
        %548 = vmatpush1.msra.mxu0 0.0
        %549 = vmatprep.subr.mxu0 0.0
        %550 = vmatpush1.msra.mxu0 0.0
        %551 = vmatprep.subr.mxu0 0.0
        %552 = vmatpush1.msra.mxu0 0.0
        %553 = vmatprep.subr.mxu0 0.0
        %554 = vmatpush1.msra.mxu0 0.0
        %555 = vmatprep.subr.mxu0 0.0
        %556 = vmatpush1.msra.mxu0 0.0
        %557 = vmatprep.subr.mxu0 0.0
        %558 = vmatpush1.msra.mxu0 0.0
        %559 = vmatprep.subr.mxu0 0.0
        %560 = vmatpush1.msra.mxu0 0.0
        %561 = vmatprep.subr.mxu0 0.0
        %562 = vmatpush1.msra.mxu0 0.0
        %563 = vmatprep.subr.mxu0 0.0
        %564 = vmatpush1.msra.mxu0 0.0
        %565 = vmatprep.subr.mxu0 0.0
        %566 = vmatpush1.msra.mxu0 0.0
        %567 = vmatprep.subr.mxu0 0.0
        %568 = vmatpush1.msra.mxu0 0.0
        %569 = vmatprep.subr.mxu0 0.0
        %570 = vmatpush1.msra.mxu0 0.0
        %571 = vmatprep.subr.mxu0 0.0
        %572 = vmatpush1.msra.mxu0 0.0
        %573 = vmatprep.subr.mxu0 0.0
        %574 = vmatpush1.msra.mxu0 0.0
        %575 = vmatprep.subr.mxu0 0.0
        %576 = vmatpush1.msra.mxu0 0.0
        %577 = vmatprep.subr.mxu0 0.0
        %578 = vmatpush1.msra.mxu0 0.0
        %579 = vmatprep.subr.mxu0 0.0
        %580 = vmatpush1.msra.mxu0 0.0
        %581 = vmatprep.mubr.f32.mxu0 0.0
        %582 = vmatmul.mubr.f32.gmra.mrb[0].mxu0 %v512
        %v583 = vpop.f32.mrb[0].mxu0
        %v584 = vadd.f32 %v508, %v583
        %v585 = vpop.f32.mrb[0].mxu0
        %586 = vmatprep.mubr.f32.mxu0 0.0
        %587 = vmatmul.mubr.f32.gmra.mrb[0].mxu0 %v515
        %v588 = vpop.f32.mrb[0].mxu0
        %v589 = vadd.f32 %v508, %v588
        %v590 = vpop.f32.mrb[0].mxu0
        %591 = vdwg.mxu0
        %v592 = vld [vmem:[%s3] sm:$0xff]
        %v593 = vld [vmem:[%s3 + $0x8] sm:$0xff]
        %v594 = vld [vmem:[%s3 + $0x10] sm:$0xff]
        %v595 = vld [vmem:[%s3 + $0x18] sm:$0xff]
        %v596 = vld [vmem:[%s4] sm:$0x1]
        %v598 = vlaneseq
        %v599 = vshrl.u32 %v598, 7
        %v600 = vsub.s32 0, %v599
        %v601 = vrot.slane %v596, %v600
        %v604 = vsel %vm510, %v498, 0
        %606 = vmatprep.subr.mxu0 0.0
        %607 = vmatpush1.msra.mxu0 %v592
        %608 = vmatprep.subr.mxu0 0.0
        %609 = vmatpush1.msra.mxu0 %v593
        %610 = vmatprep.subr.mxu0 0.0
        %611 = vmatpush1.msra.mxu0 %v594
        %612 = vmatprep.subr.mxu0 0.0
        %613 = vmatpush1.msra.mxu0 %v595
        %614 = vmatprep.subr.mxu0 0.0
        %615 = vmatpush1.msra.mxu0 0.0
        %616 = vmatprep.subr.mxu0 0.0
        %617 = vmatpush1.msra.mxu0 0.0
        %618 = vmatprep.subr.mxu0 0.0
        %619 = vmatpush1.msra.mxu0 0.0
        %620 = vmatprep.subr.mxu0 0.0
        %621 = vmatpush1.msra.mxu0 0.0
        %622 = vmatprep.subr.mxu0 0.0
        %623 = vmatpush1.msra.mxu0 0.0
        %624 = vmatprep.subr.mxu0 0.0
        %625 = vmatpush1.msra.mxu0 0.0
        %626 = vmatprep.subr.mxu0 0.0
        %627 = vmatpush1.msra.mxu0 0.0
        %628 = vmatprep.subr.mxu0 0.0
        %629 = vmatpush1.msra.mxu0 0.0
        %630 = vmatprep.subr.mxu0 0.0
        %631 = vmatpush1.msra.mxu0 0.0
        %632 = vmatprep.subr.mxu0 0.0
        %633 = vmatpush1.msra.mxu0 0.0
        %634 = vmatprep.subr.mxu0 0.0
        %635 = vmatpush1.msra.mxu0 0.0
        %636 = vmatprep.subr.mxu0 0.0
        %637 = vmatpush1.msra.mxu0 0.0
        %638 = vmatprep.subr.mxu0 0.0
        %639 = vmatpush1.msra.mxu0 0.0
        %640 = vmatprep.subr.mxu0 0.0
        %641 = vmatpush1.msra.mxu0 0.0
        %642 = vmatprep.subr.mxu0 0.0
        %643 = vmatpush1.msra.mxu0 0.0
        %644 = vmatprep.subr.mxu0 0.0
        %645 = vmatpush1.msra.mxu0 0.0
        %646 = vmatprep.subr.mxu0 0.0
        %647 = vmatpush1.msra.mxu0 0.0
        %648 = vmatprep.subr.mxu0 0.0
        %649 = vmatpush1.msra.mxu0 0.0
        %650 = vmatprep.subr.mxu0 0.0
        %651 = vmatpush1.msra.mxu0 0.0
        %652 = vmatprep.subr.mxu0 0.0
        %653 = vmatpush1.msra.mxu0 0.0
        %654 = vmatprep.subr.mxu0 0.0
        %655 = vmatpush1.msra.mxu0 0.0
        %656 = vmatprep.subr.mxu0 0.0
        %657 = vmatpush1.msra.mxu0 0.0
        %658 = vmatprep.subr.mxu0 0.0
        %659 = vmatpush1.msra.mxu0 0.0
        %660 = vmatprep.subr.mxu0 0.0
        %661 = vmatpush1.msra.mxu0 0.0
        %662 = vmatprep.subr.mxu0 0.0
        %663 = vmatpush1.msra.mxu0 0.0
        %664 = vmatprep.subr.mxu0 0.0
        %665 = vmatpush1.msra.mxu0 0.0
        %666 = vmatprep.subr.mxu0 0.0
        %667 = vmatpush1.msra.mxu0 0.0
        %668 = vmatprep.subr.mxu0 0.0
        %669 = vmatpush1.msra.mxu0 0.0
        %670 = vmatprep.mubr.f32.mxu0 0.0
        %671 = vmatmul.mubr.f32.gmra.mrb[0].mxu0 %v604
        %v672 = vpop.f32.mrb[0].mxu0
        %v673 = vadd.f32 %v601, %v672
        %v674 = vpop.f32.mrb[0].mxu0
        %675 = vdwg.mxu0
        %vm676 = vcmask 64512
        %v678 = vsel %vm676, %v584, 0
        %v681 = vsel %vm676, %v589, 0
        %v684 = vsel %vm676, %v673, 0
        %686 = vmatprep.subr.mxu0 0.0
        %687 = vmatpush1.xpose.msra.mxu0 %v684
        %688 = vmatprep.subr.mxu0 0.0
        %689 = vmatpush1.xpose.msra.mxu0 0.0
        %690 = vmatprep.subr.mxu0 0.0
        %691 = vmatpush1.xpose.msra.mxu0 0.0
        %692 = vmatprep.subr.mxu0 0.0
        %693 = vmatpush1.xpose.msra.mxu0 0.0
        %694 = vmatprep.subr.mxu0 0.0
        %695 = vmatpush1.xpose.msra.mxu0 0.0
        %696 = vmatprep.subr.mxu0 0.0
        %697 = vmatpush1.xpose.msra.mxu0 0.0
        %698 = vmatprep.subr.mxu0 0.0
        %699 = vmatpush1.xpose.msra.mxu0 0.0
        %700 = vmatprep.subr.mxu0 0.0
        %701 = vmatpush1.xpose.msra.mxu0 0.0
        %702 = vmatprep.subr.mxu0 0.0
        %703 = vmatpush1.xpose.msra.mxu0 0.0
        %704 = vmatprep.subr.mxu0 0.0
        %705 = vmatpush1.xpose.msra.mxu0 0.0
        %706 = vmatprep.subr.mxu0 0.0
        %707 = vmatpush1.xpose.msra.mxu0 0.0
        %708 = vmatprep.subr.mxu0 0.0
        %709 = vmatpush1.xpose.msra.mxu0 0.0
        %710 = vmatprep.subr.mxu0 0.0
        %711 = vmatpush1.xpose.msra.mxu0 0.0
        %712 = vmatprep.subr.mxu0 0.0
        %713 = vmatpush1.xpose.msra.mxu0 0.0
        %714 = vmatprep.subr.mxu0 0.0
        %715 = vmatpush1.xpose.msra.mxu0 0.0
        %716 = vmatprep.subr.mxu0 0.0
        %717 = vmatpush1.xpose.msra.mxu0 0.0
        %718 = vmatprep.subr.mxu0 0.0
        %719 = vmatpush1.xpose.msra.mxu0 0.0
        %720 = vmatprep.subr.mxu0 0.0
        %721 = vmatpush1.xpose.msra.mxu0 0.0
        %722 = vmatprep.subr.mxu0 0.0
        %723 = vmatpush1.xpose.msra.mxu0 0.0
        %724 = vmatprep.subr.mxu0 0.0
        %725 = vmatpush1.xpose.msra.mxu0 0.0
        %726 = vmatprep.subr.mxu0 0.0
        %727 = vmatpush1.xpose.msra.mxu0 0.0
        %728 = vmatprep.subr.mxu0 0.0
        %729 = vmatpush1.xpose.msra.mxu0 0.0
        %730 = vmatprep.subr.mxu0 0.0
        %731 = vmatpush1.xpose.msra.mxu0 0.0
        %732 = vmatprep.subr.mxu0 0.0
        %733 = vmatpush1.xpose.msra.mxu0 0.0
        %734 = vmatprep.subr.mxu0 0.0
        %735 = vmatpush1.xpose.msra.mxu0 0.0
        %736 = vmatprep.subr.mxu0 0.0
        %737 = vmatpush1.xpose.msra.mxu0 0.0
        %738 = vmatprep.subr.mxu0 0.0
        %739 = vmatpush1.xpose.msra.mxu0 0.0
        %740 = vmatprep.subr.mxu0 0.0
        %741 = vmatpush1.xpose.msra.mxu0 0.0
        %742 = vmatprep.subr.mxu0 0.0
        %743 = vmatpush1.xpose.msra.mxu0 0.0
        %744 = vmatprep.subr.mxu0 0.0
        %745 = vmatpush1.xpose.msra.mxu0 0.0
        %746 = vmatprep.subr.mxu0 0.0
        %747 = vmatpush1.xpose.msra.mxu0 0.0
        %748 = vmatprep.subr.mxu0 0.0
        %749 = vmatpush1.xpose.msra.mxu0 0.0
        %750 = vmatprep.mubr.f32.mxu0 0.0
        %751 = vmatmul.mubr.f32.gmra.mrb[0].mxu0 %v678
        %v752 = vpop.f32.mrb[0].mxu0
        %v753 = vadd.f32 0.0, %v752
        %v754 = vpop.f32.mrb[0].mxu0
        %755 = vmatprep.mubr.f32.mxu0 0.0
        %756 = vmatmul.mubr.f32.gmra.mrb[0].mxu0 %v681
        %v757 = vpop.f32.mrb[0].mxu0
        %v758 = vadd.f32 0.0, %v757
        %v759 = vpop.f32.mrb[0].mxu0
        %760 = vdwg.mxu0
        %v761 = vsel %vm676, %v753, -inf
        %762 = vmax.xlane.f32.xlu0 %v761
        %v763 = vpop.xlane.xlu0 %762
        %v764 = vsel %vm676, %v758, -inf
        %765 = vmax.xlane.f32.xlu0 %v764
        %v766 = vpop.xlane.xlu0 %765
        %v767 = vsub.f32 %v753, %v763
        %v768 = vsub.f32 %v758, %v766
        %v769 = vmul.f32 %v767, 1.442695
        %v770 = vpow.pop %v769
        %v771 = vmul.f32 %v768, 1.442695
        %v772 = vpow.pop %v771
        %v773 = vsel %vm676, %v770, 0.0
        %774 = vadd.xlane.f32.xlu0 %v773
        %v775 = vpop.xlane.xlu0 %774
        %v776 = vsel %vm676, %v772, 0.0
        %777 = vadd.xlane.f32.xlu0 %v776
        %v778 = vpop.xlane.xlu0 %777
        %v779 = vrcp.pop %v775
        %v780 = vrcp.pop %v778
        %v781 = vmul.f32 %v770, %v779
        %v782 = vmul.f32 %v772, %v780
        %783 = vrot.lane.b32.xlu0 %v673, 96
        %v784 = vpop.permute.xlu0 %783
        %v787 = vsel %vm676, %v781, 0
        %v790 = vsel %vm676, %v782, 0
        %792 = vmatprep.subr.mxu0 0.0
        %793 = vmatpush1.msra.mxu0 %v784
        %794 = vmatprep.subr.mxu0 0.0
        %795 = vmatpush1.msra.mxu0 0.0
        %796 = vmatprep.subr.mxu0 0.0
        %797 = vmatpush1.msra.mxu0 0.0
        %798 = vmatprep.subr.mxu0 0.0
        %799 = vmatpush1.msra.mxu0 0.0
        %800 = vmatprep.subr.mxu0 0.0
        %801 = vmatpush1.msra.mxu0 0.0
        %802 = vmatprep.subr.mxu0 0.0
        %803 = vmatpush1.msra.mxu0 0.0
        %804 = vmatprep.subr.mxu0 0.0
        %805 = vmatpush1.msra.mxu0 0.0
        %806 = vmatprep.subr.mxu0 0.0
        %807 = vmatpush1.msra.mxu0 0.0
        %808 = vmatprep.subr.mxu0 0.0
        %809 = vmatpush1.msra.mxu0 0.0
        %810 = vmatprep.subr.mxu0 0.0
        %811 = vmatpush1.msra.mxu0 0.0
        %812 = vmatprep.subr.mxu0 0.0
        %813 = vmatpush1.msra.mxu0 0.0
        %814 = vmatprep.subr.mxu0 0.0
        %815 = vmatpush1.msra.mxu0 0.0
        %816 = vmatprep.subr.mxu0 0.0
        %817 = vmatpush1.msra.mxu0 0.0
        %818 = vmatprep.subr.mxu0 0.0
        %819 = vmatpush1.msra.mxu0 0.0
        %820 = vmatprep.subr.mxu0 0.0
        %821 = vmatpush1.msra.mxu0 0.0
        %822 = vmatprep.subr.mxu0 0.0
        %823 = vmatpush1.msra.mxu0 0.0
        %824 = vmatprep.subr.mxu0 0.0
        %825 = vmatpush1.msra.mxu0 0.0
        %826 = vmatprep.subr.mxu0 0.0
        %827 = vmatpush1.msra.mxu0 0.0
        %828 = vmatprep.subr.mxu0 0.0
        %829 = vmatpush1.msra.mxu0 0.0
        %830 = vmatprep.subr.mxu0 0.0
        %831 = vmatpush1.msra.mxu0 0.0
        %832 = vmatprep.subr.mxu0 0.0
        %833 = vmatpush1.msra.mxu0 0.0
        %834 = vmatprep.subr.mxu0 0.0
        %835 = vmatpush1.msra.mxu0 0.0
        %836 = vmatprep.subr.mxu0 0.0
        %837 = vmatpush1.msra.mxu0 0.0
        %838 = vmatprep.subr.mxu0 0.0
        %839 = vmatpush1.msra.mxu0 0.0
        %840 = vmatprep.subr.mxu0 0.0
        %841 = vmatpush1.msra.mxu0 0.0
        %842 = vmatprep.subr.mxu0 0.0
        %843 = vmatpush1.msra.mxu0 0.0
        %844 = vmatprep.subr.mxu0 0.0
        %845 = vmatpush1.msra.mxu0 0.0
        %846 = vmatprep.subr.mxu0 0.0
        %847 = vmatpush1.msra.mxu0 0.0
        %848 = vmatprep.subr.mxu0 0.0
        %849 = vmatpush1.msra.mxu0 0.0
        %850 = vmatprep.subr.mxu0 0.0
        %851 = vmatpush1.msra.mxu0 0.0
        %852 = vmatprep.subr.mxu0 0.0
        %853 = vmatpush1.msra.mxu0 0.0
        %854 = vmatprep.subr.mxu0 0.0
        %855 = vmatpush1.msra.mxu0 0.0
        %856 = vmatprep.mubr.f32.mxu0 0.0
        %857 = vmatmul.mubr.f32.gmra.mrb[0].mxu0 %v787
        %v858 = vpop.f32.mrb[0].mxu0
        %v859 = vadd.f32 0.0, %v858
        %v860 = vpop.f32.mrb[0].mxu0
        %861 = vmatprep.mubr.f32.mxu0 0.0
        %862 = vmatmul.mubr.f32.gmra.mrb[0].mxu0 %v790
        %v863 = vpop.f32.mrb[0].mxu0
        %v864 = vadd.f32 0.0, %v863
        %v865 = vpop.f32.mrb[0].mxu0
        %866 = vdwg.mxu0
        %867 = vst.msk [vmem:[#allocation2] sm:$0xff] %vm676, %v859
        %868 = vst.msk [vmem:[#allocation2 + $0x8] sm:$0xff] %vm676, %v864
        %869 = vrot.lane.b32.xlu0 %v584, 120
        %v870 = vpop.permute.xlu0 %869
        %871 = vrot.lane.b32.xlu0 %v589, 120
        %v872 = vpop.permute.xlu0 %871
        %873 = vrot.lane.b32.xlu0 %v673, 120
        %v874 = vpop.permute.xlu0 %873
        %v875 = vsel %vm676, %v870, 0
        %v877 = vsel %vm676, %v872, 0
        %v879 = vsel %vm676, %v874, 0
        %881 = vmatprep.subr.mxu0 0.0
        %882 = vmatpush1.xpose.msra.mxu0 %v879
        %883 = vmatprep.subr.mxu0 0.0
        %884 = vmatpush1.xpose.msra.mxu0 0.0
        %885 = vmatprep.subr.mxu0 0.0
        %886 = vmatpush1.xpose.msra.mxu0 0.0
        %887 = vmatprep.subr.mxu0 0.0
        %888 = vmatpush1.xpose.msra.mxu0 0.0
        %889 = vmatprep.subr.mxu0 0.0
        %890 = vmatpush1.xpose.msra.mxu0 0.0
        %891 = vmatprep.subr.mxu0 0.0
        %892 = vmatpush1.xpose.msra.mxu0 0.0
        %893 = vmatprep.subr.mxu0 0.0
        %894 = vmatpush1.xpose.msra.mxu0 0.0
        %895 = vmatprep.subr.mxu0 0.0
        %896 = vmatpush1.xpose.msra.mxu0 0.0
        %897 = vmatprep.subr.mxu0 0.0
        %898 = vmatpush1.xpose.msra.mxu0 0.0
        %899 = vmatprep.subr.mxu0 0.0
        %900 = vmatpush1.xpose.msra.mxu0 0.0
        %901 = vmatprep.subr.mxu0 0.0
        %902 = vmatpush1.xpose.msra.mxu0 0.0
        %903 = vmatprep.subr.mxu0 0.0
        %904 = vmatpush1.xpose.msra.mxu0 0.0
        %905 = vmatprep.subr.mxu0 0.0
        %906 = vmatpush1.xpose.msra.mxu0 0.0
        %907 = vmatprep.subr.mxu0 0.0
        %908 = vmatpush1.xpose.msra.mxu0 0.0
        %909 = vmatprep.subr.mxu0 0.0
        %910 = vmatpush1.xpose.msra.mxu0 0.0
        %911 = vmatprep.subr.mxu0 0.0
        %912 = vmatpush1.xpose.msra.mxu0 0.0
        %913 = vmatprep.subr.mxu0 0.0
        %914 = vmatpush1.xpose.msra.mxu0 0.0
        %915 = vmatprep.subr.mxu0 0.0
        %916 = vmatpush1.xpose.msra.mxu0 0.0
        %917 = vmatprep.subr.mxu0 0.0
        %918 = vmatpush1.xpose.msra.mxu0 0.0
        %919 = vmatprep.subr.mxu0 0.0
        %920 = vmatpush1.xpose.msra.mxu0 0.0
        %921 = vmatprep.subr.mxu0 0.0
        %922 = vmatpush1.xpose.msra.mxu0 0.0
        %923 = vmatprep.subr.mxu0 0.0
        %924 = vmatpush1.xpose.msra.mxu0 0.0
        %925 = vmatprep.subr.mxu0 0.0
        %926 = vmatpush1.xpose.msra.mxu0 0.0
        %927 = vmatprep.subr.mxu0 0.0
        %928 = vmatpush1.xpose.msra.mxu0 0.0
        %929 = vmatprep.subr.mxu0 0.0
        %930 = vmatpush1.xpose.msra.mxu0 0.0
        %931 = vmatprep.subr.mxu0 0.0
        %932 = vmatpush1.xpose.msra.mxu0 0.0
        %933 = vmatprep.subr.mxu0 0.0
        %934 = vmatpush1.xpose.msra.mxu0 0.0
        %935 = vmatprep.subr.mxu0 0.0
        %936 = vmatpush1.xpose.msra.mxu0 0.0
        %937 = vmatprep.subr.mxu0 0.0
        %938 = vmatpush1.xpose.msra.mxu0 0.0
        %939 = vmatprep.subr.mxu0 0.0
        %940 = vmatpush1.xpose.msra.mxu0 0.0
        %941 = vmatprep.subr.mxu0 0.0
        %942 = vmatpush1.xpose.msra.mxu0 0.0
        %943 = vmatprep.subr.mxu0 0.0
        %944 = vmatpush1.xpose.msra.mxu0 0.0
        %945 = vmatprep.mubr.f32.mxu0 0.0
        %946 = vmatmul.mubr.f32.gmra.mrb[0].mxu0 %v875
        %v947 = vpop.f32.mrb[0].mxu0
        %v948 = vadd.f32 0.0, %v947
        %v949 = vpop.f32.mrb[0].mxu0
        %950 = vmatprep.mubr.f32.mxu0 0.0
        %951 = vmatmul.mubr.f32.gmra.mrb[0].mxu0 %v877
        %v952 = vpop.f32.mrb[0].mxu0
        %v953 = vadd.f32 0.0, %v952
        %v954 = vpop.f32.mrb[0].mxu0
        %955 = vdwg.mxu0
        %v956 = vsel %vm676, %v948, -inf
        %957 = vmax.xlane.f32.xlu0 %v956
        %v958 = vpop.xlane.xlu0 %957
        %v959 = vsel %vm676, %v953, -inf
        %960 = vmax.xlane.f32.xlu0 %v959
        %v961 = vpop.xlane.xlu0 %960
        %v962 = vsub.f32 %v948, %v958
        %v963 = vsub.f32 %v953, %v961
        %v964 = vmul.f32 %v962, 1.442695
        %v965 = vpow.pop %v964
        %v966 = vmul.f32 %v963, 1.442695
        %v967 = vpow.pop %v966
        %v968 = vsel %vm676, %v965, 0.0
        %969 = vadd.xlane.f32.xlu0 %v968
        %v970 = vpop.xlane.xlu0 %969
        %v971 = vsel %vm676, %v967, 0.0
        %972 = vadd.xlane.f32.xlu0 %v971
        %v973 = vpop.xlane.xlu0 %972
        %v974 = vrcp.pop %v970
        %v975 = vrcp.pop %v973
        %v976 = vmul.f32 %v965, %v974
        %v977 = vmul.f32 %v967, %v975
        %978 = vrot.lane.b32.xlu0 %v673, 88
        %v979 = vpop.permute.xlu0 %978
        %v982 = vsel %vm676, %v976, 0
        %v985 = vsel %vm676, %v977, 0
        %987 = vmatprep.subr.mxu0 0.0
        %988 = vmatpush1.msra.mxu0 %v979
        %989 = vmatprep.subr.mxu0 0.0
        %990 = vmatpush1.msra.mxu0 0.0
        %991 = vmatprep.subr.mxu0 0.0
        %992 = vmatpush1.msra.mxu0 0.0
        %993 = vmatprep.subr.mxu0 0.0
        %994 = vmatpush1.msra.mxu0 0.0
        %995 = vmatprep.subr.mxu0 0.0
        %996 = vmatpush1.msra.mxu0 0.0
        %997 = vmatprep.subr.mxu0 0.0
        %998 = vmatpush1.msra.mxu0 0.0
        %999 = vmatprep.subr.mxu0 0.0
        %1000 = vmatpush1.msra.mxu0 0.0
        %1001 = vmatprep.subr.mxu0 0.0
        %1002 = vmatpush1.msra.mxu0 0.0
        %1003 = vmatprep.subr.mxu0 0.0
        %1004 = vmatpush1.msra.mxu0 0.0
        %1005 = vmatprep.subr.mxu0 0.0
        %1006 = vmatpush1.msra.mxu0 0.0
        %1007 = vmatprep.subr.mxu0 0.0
        %1008 = vmatpush1.msra.mxu0 0.0
        %1009 = vmatprep.subr.mxu0 0.0
        %1010 = vmatpush1.msra.mxu0 0.0
        %1011 = vmatprep.subr.mxu0 0.0
        %1012 = vmatpush1.msra.mxu0 0.0
        %1013 = vmatprep.subr.mxu0 0.0
        %1014 = vmatpush1.msra.mxu0 0.0
        %1015 = vmatprep.subr.mxu0 0.0
        %1016 = vmatpush1.msra.mxu0 0.0
        %1017 = vmatprep.subr.mxu0 0.0
        %1018 = vmatpush1.msra.mxu0 0.0
        %1019 = vmatprep.subr.mxu0 0.0
        %1020 = vmatpush1.msra.mxu0 0.0
        %1021 = vmatprep.subr.mxu0 0.0
        %1022 = vmatpush1.msra.mxu0 0.0
        %1023 = vmatprep.subr.mxu0 0.0
        %1024 = vmatpush1.msra.mxu0 0.0
        %1025 = vmatprep.subr.mxu0 0.0
        %1026 = vmatpush1.msra.mxu0 0.0
        %1027 = vmatprep.subr.mxu0 0.0
        %1028 = vmatpush1.msra.mxu0 0.0
        %1029 = vmatprep.subr.mxu0 0.0
        %1030 = vmatpush1.msra.mxu0 0.0
        %1031 = vmatprep.subr.mxu0 0.0
        %1032 = vmatpush1.msra.mxu0 0.0
        %1033 = vmatprep.subr.mxu0 0.0
        %1034 = vmatpush1.msra.mxu0 0.0
        %1035 = vmatprep.subr.mxu0 0.0
        %1036 = vmatpush1.msra.mxu0 0.0
        %1037 = vmatprep.subr.mxu0 0.0
        %1038 = vmatpush1.msra.mxu0 0.0
        %1039 = vmatprep.subr.mxu0 0.0
        %1040 = vmatpush1.msra.mxu0 0.0
        %1041 = vmatprep.subr.mxu0 0.0
        %1042 = vmatpush1.msra.mxu0 0.0
        %1043 = vmatprep.subr.mxu0 0.0
        %1044 = vmatpush1.msra.mxu0 0.0
        %1045 = vmatprep.subr.mxu0 0.0
        %1046 = vmatpush1.msra.mxu0 0.0
        %1047 = vmatprep.subr.mxu0 0.0
        %1048 = vmatpush1.msra.mxu0 0.0
        %1049 = vmatprep.subr.mxu0 0.0
        %1050 = vmatpush1.msra.mxu0 0.0
        %1051 = vmatprep.mubr.f32.mxu0 0.0
        %1052 = vmatmul.mubr.f32.gmra.mrb[0].mxu0 %v982
        %v1053 = vpop.f32.mrb[0].mxu0
        %v1054 = vadd.f32 0.0, %v1053
        %v1055 = vpop.f32.mrb[0].mxu0
        %1056 = vmatprep.mubr.f32.mxu0 0.0
        %1057 = vmatmul.mubr.f32.gmra.mrb[0].mxu0 %v985
        %v1058 = vpop.f32.mrb[0].mxu0
        %v1059 = vadd.f32 0.0, %v1058
        %v1060 = vpop.f32.mrb[0].mxu0
        %1061 = vdwg.mxu0
        %1064 = vrot.lane.b32.xlu0 %v1054, 8
        %v1065 = vpop.permute.xlu0 %1064
        %1066 = vrot.lane.b32.xlu0 %v1059, 8
        %v1067 = vpop.permute.xlu0 %1066
        %vm1070 = vcmask 130112
        %1071 = vst.msk [vmem:[#allocation2] sm:$0xff] %vm1070, %v1065
        %1072 = vst.msk [vmem:[#allocation2 + $0x8] sm:$0xff] %vm1070, %v1067
        %1073 = vrot.lane.b32.xlu0 %v584, 112
        %v1074 = vpop.permute.xlu0 %1073
        %1075 = vrot.lane.b32.xlu0 %v589, 112
        %v1076 = vpop.permute.xlu0 %1075
        %1077 = vrot.lane.b32.xlu0 %v673, 112
        %v1078 = vpop.permute.xlu0 %1077
        %v1079 = vsel %vm676, %v1074, 0
        %v1081 = vsel %vm676, %v1076, 0
        %v1083 = vsel %vm676, %v1078, 0
        %1085 = vmatprep.subr.mxu0 0.0
        %1086 = vmatpush1.xpose.msra.mxu0 %v1083
        %1087 = vmatprep.subr.mxu0 0.0
        %1088 = vmatpush1.xpose.msra.mxu0 0.0
        %1089 = vmatprep.subr.mxu0 0.0
        %1090 = vmatpush1.xpose.msra.mxu0 0.0
        %1091 = vmatprep.subr.mxu0 0.0
        %1092 = vmatpush1.xpose.msra.mxu0 0.0
        %1093 = vmatprep.subr.mxu0 0.0
        %1094 = vmatpush1.xpose.msra.mxu0 0.0
        %1095 = vmatprep.subr.mxu0 0.0
        %1096 = vmatpush1.xpose.msra.mxu0 0.0
        %1097 = vmatprep.subr.mxu0 0.0
        %1098 = vmatpush1.xpose.msra.mxu0 0.0
        %1099 = vmatprep.subr.mxu0 0.0
        %1100 = vmatpush1.xpose.msra.mxu0 0.0
        %1101 = vmatprep.subr.mxu0 0.0
        %1102 = vmatpush1.xpose.msra.mxu0 0.0
        %1103 = vmatprep.subr.mxu0 0.0
        %1104 = vmatpush1.xpose.msra.mxu0 0.0
        %1105 = vmatprep.subr.mxu0 0.0
        %1106 = vmatpush1.xpose.msra.mxu0 0.0
        %1107 = vmatprep.subr.mxu0 0.0
        %1108 = vmatpush1.xpose.msra.mxu0 0.0
        %1109 = vmatprep.subr.mxu0 0.0
        %1110 = vmatpush1.xpose.msra.mxu0 0.0
        %1111 = vmatprep.subr.mxu0 0.0
        %1112 = vmatpush1.xpose.msra.mxu0 0.0
        %1113 = vmatprep.subr.mxu0 0.0
        %1114 = vmatpush1.xpose.msra.mxu0 0.0
        %1115 = vmatprep.subr.mxu0 0.0
        %1116 = vmatpush1.xpose.msra.mxu0 0.0
        %1117 = vmatprep.subr.mxu0 0.0
        %1118 = vmatpush1.xpose.msra.mxu0 0.0
        %1119 = vmatprep.subr.mxu0 0.0
        %1120 = vmatpush1.xpose.msra.mxu0 0.0
        %1121 = vmatprep.subr.mxu0 0.0
        %1122 = vmatpush1.xpose.msra.mxu0 0.0
        %1123 = vmatprep.subr.mxu0 0.0
        %1124 = vmatpush1.xpose.msra.mxu0 0.0
        %1125 = vmatprep.subr.mxu0 0.0
        %1126 = vmatpush1.xpose.msra.mxu0 0.0
        %1127 = vmatprep.subr.mxu0 0.0
        %1128 = vmatpush1.xpose.msra.mxu0 0.0
        %1129 = vmatprep.subr.mxu0 0.0
        %1130 = vmatpush1.xpose.msra.mxu0 0.0
        %1131 = vmatprep.subr.mxu0 0.0
        %1132 = vmatpush1.xpose.msra.mxu0 0.0
        %1133 = vmatprep.subr.mxu0 0.0
        %1134 = vmatpush1.xpose.msra.mxu0 0.0
        %1135 = vmatprep.subr.mxu0 0.0
        %1136 = vmatpush1.xpose.msra.mxu0 0.0
        %1137 = vmatprep.subr.mxu0 0.0
        %1138 = vmatpush1.xpose.msra.mxu0 0.0
        %1139 = vmatprep.subr.mxu0 0.0
        %1140 = vmatpush1.xpose.msra.mxu0 0.0
        %1141 = vmatprep.subr.mxu0 0.0
        %1142 = vmatpush1.xpose.msra.mxu0 0.0
        %1143 = vmatprep.subr.mxu0 0.0
        %1144 = vmatpush1.xpose.msra.mxu0 0.0
        %1145 = vmatprep.subr.mxu0 0.0
        %1146 = vmatpush1.xpose.msra.mxu0 0.0
        %1147 = vmatprep.subr.mxu0 0.0
        %1148 = vmatpush1.xpose.msra.mxu0 0.0
        %1149 = vmatprep.mubr.f32.mxu0 0.0
        %1150 = vmatmul.mubr.f32.gmra.mrb[0].mxu0 %v1079
        %v1151 = vpop.f32.mrb[0].mxu0
        %v1152 = vadd.f32 0.0, %v1151
        %v1153 = vpop.f32.mrb[0].mxu0
        %1154 = vmatprep.mubr.f32.mxu0 0.0
        %1155 = vmatmul.mubr.f32.gmra.mrb[0].mxu0 %v1081
        %v1156 = vpop.f32.mrb[0].mxu0
        %v1157 = vadd.f32 0.0, %v1156
        %v1158 = vpop.f32.mrb[0].mxu0
        %1159 = vdwg.mxu0
        %v1160 = vsel %vm676, %v1152, -inf
        %1161 = vmax.xlane.f32.xlu0 %v1160
        %v1162 = vpop.xlane.xlu0 %1161
        %v1163 = vsel %vm676, %v1157, -inf
        %1164 = vmax.xlane.f32.xlu0 %v1163
        %v1165 = vpop.xlane.xlu0 %1164
        %v1166 = vsub.f32 %v1152, %v1162
        %v1167 = vsub.f32 %v1157, %v1165
        %v1168 = vmul.f32 %v1166, 1.442695
        %v1169 = vpow.pop %v1168
        %v1170 = vmul.f32 %v1167, 1.442695
        %v1171 = vpow.pop %v1170
        %v1172 = vsel %vm676, %v1169, 0.0
        %1173 = vadd.xlane.f32.xlu0 %v1172
        %v1174 = vpop.xlane.xlu0 %1173
        %v1175 = vsel %vm676, %v1171, 0.0
        %1176 = vadd.xlane.f32.xlu0 %v1175
        %v1177 = vpop.xlane.xlu0 %1176
        %v1178 = vrcp.pop %v1174
        %v1179 = vrcp.pop %v1177
        %v1180 = vmul.f32 %v1169, %v1178
        %v1181 = vmul.f32 %v1171, %v1179
        %1182 = vrot.lane.b32.xlu0 %v673, 80
        %v1183 = vpop.permute.xlu0 %1182
        %v1186 = vsel %vm676, %v1180, 0
        %v1189 = vsel %vm676, %v1181, 0
        %1191 = vmatprep.subr.mxu0 0.0
        %1192 = vmatpush1.msra.mxu0 %v1183
        %1193 = vmatprep.subr.mxu0 0.0
        %1194 = vmatpush1.msra.mxu0 0.0
        %1195 = vmatprep.subr.mxu0 0.0
        %1196 = vmatpush1.msra.mxu0 0.0
        %1197 = vmatprep.subr.mxu0 0.0
        %1198 = vmatpush1.msra.mxu0 0.0
        %1199 = vmatprep.subr.mxu0 0.0
        %1200 = vmatpush1.msra.mxu0 0.0
        %1201 = vmatprep.subr.mxu0 0.0
        %1202 = vmatpush1.msra.mxu0 0.0
        %1203 = vmatprep.subr.mxu0 0.0
        %1204 = vmatpush1.msra.mxu0 0.0
        %1205 = vmatprep.subr.mxu0 0.0
        %1206 = vmatpush1.msra.mxu0 0.0
        %1207 = vmatprep.subr.mxu0 0.0
        %1208 = vmatpush1.msra.mxu0 0.0
        %1209 = vmatprep.subr.mxu0 0.0
        %1210 = vmatpush1.msra.mxu0 0.0
        %1211 = vmatprep.subr.mxu0 0.0
        %1212 = vmatpush1.msra.mxu0 0.0
        %1213 = vmatprep.subr.mxu0 0.0
        %1214 = vmatpush1.msra.mxu0 0.0
        %1215 = vmatprep.subr.mxu0 0.0
        %1216 = vmatpush1.msra.mxu0 0.0
        %1217 = vmatprep.subr.mxu0 0.0
        %1218 = vmatpush1.msra.mxu0 0.0
        %1219 = vmatprep.subr.mxu0 0.0
        %1220 = vmatpush1.msra.mxu0 0.0
        %1221 = vmatprep.subr.mxu0 0.0
        %1222 = vmatpush1.msra.mxu0 0.0
        %1223 = vmatprep.subr.mxu0 0.0
        %1224 = vmatpush1.msra.mxu0 0.0
        %1225 = vmatprep.subr.mxu0 0.0
        %1226 = vmatpush1.msra.mxu0 0.0
        %1227 = vmatprep.subr.mxu0 0.0
        %1228 = vmatpush1.msra.mxu0 0.0
        %1229 = vmatprep.subr.mxu0 0.0
        %1230 = vmatpush1.msra.mxu0 0.0
        %1231 = vmatprep.subr.mxu0 0.0
        %1232 = vmatpush1.msra.mxu0 0.0
        %1233 = vmatprep.subr.mxu0 0.0
        %1234 = vmatpush1.msra.mxu0 0.0
        %1235 = vmatprep.subr.mxu0 0.0
        %1236 = vmatpush1.msra.mxu0 0.0
        %1237 = vmatprep.subr.mxu0 0.0
        %1238 = vmatpush1.msra.mxu0 0.0
        %1239 = vmatprep.subr.mxu0 0.0
        %1240 = vmatpush1.msra.mxu0 0.0
        %1241 = vmatprep.subr.mxu0 0.0
        %1242 = vmatpush1.msra.mxu0 0.0
        %1243 = vmatprep.subr.mxu0 0.0
        %1244 = vmatpush1.msra.mxu0 0.0
        %1245 = vmatprep.subr.mxu0 0.0
        %1246 = vmatpush1.msra.mxu0 0.0
        %1247 = vmatprep.subr.mxu0 0.0
        %1248 = vmatpush1.msra.mxu0 0.0
        %1249 = vmatprep.subr.mxu0 0.0
        %1250 = vmatpush1.msra.mxu0 0.0
        %1251 = vmatprep.subr.mxu0 0.0
        %1252 = vmatpush1.msra.mxu0 0.0
        %1253 = vmatprep.subr.mxu0 0.0
        %1254 = vmatpush1.msra.mxu0 0.0
        %1255 = vmatprep.mubr.f32.mxu0 0.0
        %1256 = vmatmul.mubr.f32.gmra.mrb[0].mxu0 %v1186
        %v1257 = vpop.f32.mrb[0].mxu0
        %v1258 = vadd.f32 0.0, %v1257
        %v1259 = vpop.f32.mrb[0].mxu0
        %1260 = vmatprep.mubr.f32.mxu0 0.0
        %1261 = vmatmul.mubr.f32.gmra.mrb[0].mxu0 %v1189
        %v1262 = vpop.f32.mrb[0].mxu0
        %v1263 = vadd.f32 0.0, %v1262
        %v1264 = vpop.f32.mrb[0].mxu0
        %1265 = vdwg.mxu0
        %1268 = vrot.lane.b32.xlu0 %v1258, 16
        %v1269 = vpop.permute.xlu0 %1268
        %1270 = vrot.lane.b32.xlu0 %v1263, 16
        %v1271 = vpop.permute.xlu0 %1270
        %vm1274 = vcmask 195712
        %1275 = vst.msk [vmem:[#allocation2] sm:$0xff] %vm1274, %v1269
        %1276 = vst.msk [vmem:[#allocation2 + $0x8] sm:$0xff] %vm1274, %v1271
        %1277 = vrot.lane.b32.xlu0 %v584, 104
        %v1278 = vpop.permute.xlu0 %1277
        %1279 = vrot.lane.b32.xlu0 %v589, 104
        %v1280 = vpop.permute.xlu0 %1279
        %1281 = vrot.lane.b32.xlu0 %v673, 104
        %v1282 = vpop.permute.xlu0 %1281
        %v1283 = vsel %vm676, %v1278, 0
        %v1285 = vsel %vm676, %v1280, 0
        %v1287 = vsel %vm676, %v1282, 0
        %1289 = vmatprep.subr.mxu0 0.0
        %1290 = vmatpush1.xpose.msra.mxu0 %v1287
        %1291 = vmatprep.subr.mxu0 0.0
        %1292 = vmatpush1.xpose.msra.mxu0 0.0
        %1293 = vmatprep.subr.mxu0 0.0
        %1294 = vmatpush1.xpose.msra.mxu0 0.0
        %1295 = vmatprep.subr.mxu0 0.0
        %1296 = vmatpush1.xpose.msra.mxu0 0.0
        %1297 = vmatprep.subr.mxu0 0.0
        %1298 = vmatpush1.xpose.msra.mxu0 0.0
        %1299 = vmatprep.subr.mxu0 0.0
        %1300 = vmatpush1.xpose.msra.mxu0 0.0
        %1301 = vmatprep.subr.mxu0 0.0
        %1302 = vmatpush1.xpose.msra.mxu0 0.0
        %1303 = vmatprep.subr.mxu0 0.0
        %1304 = vmatpush1.xpose.msra.mxu0 0.0
        %1305 = vmatprep.subr.mxu0 0.0
        %1306 = vmatpush1.xpose.msra.mxu0 0.0
        %1307 = vmatprep.subr.mxu0 0.0
        %1308 = vmatpush1.xpose.msra.mxu0 0.0
        %1309 = vmatprep.subr.mxu0 0.0
        %1310 = vmatpush1.xpose.msra.mxu0 0.0
        %1311 = vmatprep.subr.mxu0 0.0
        %1312 = vmatpush1.xpose.msra.mxu0 0.0
        %1313 = vmatprep.subr.mxu0 0.0
        %1314 = vmatpush1.xpose.msra.mxu0 0.0
        %1315 = vmatprep.subr.mxu0 0.0
        %1316 = vmatpush1.xpose.msra.mxu0 0.0
        %1317 = vmatprep.subr.mxu0 0.0
        %1318 = vmatpush1.xpose.msra.mxu0 0.0
        %1319 = vmatprep.subr.mxu0 0.0
        %1320 = vmatpush1.xpose.msra.mxu0 0.0
        %1321 = vmatprep.subr.mxu0 0.0
        %1322 = vmatpush1.xpose.msra.mxu0 0.0
        %1323 = vmatprep.subr.mxu0 0.0
        %1324 = vmatpush1.xpose.msra.mxu0 0.0
        %1325 = vmatprep.subr.mxu0 0.0
        %1326 = vmatpush1.xpose.msra.mxu0 0.0
        %1327 = vmatprep.subr.mxu0 0.0
        %1328 = vmatpush1.xpose.msra.mxu0 0.0
        %1329 = vmatprep.subr.mxu0 0.0
        %1330 = vmatpush1.xpose.msra.mxu0 0.0
        %1331 = vmatprep.subr.mxu0 0.0
        %1332 = vmatpush1.xpose.msra.mxu0 0.0
        %1333 = vmatprep.subr.mxu0 0.0
        %1334 = vmatpush1.xpose.msra.mxu0 0.0
        %1335 = vmatprep.subr.mxu0 0.0
        %1336 = vmatpush1.xpose.msra.mxu0 0.0
        %1337 = vmatprep.subr.mxu0 0.0
        %1338 = vmatpush1.xpose.msra.mxu0 0.0
        %1339 = vmatprep.subr.mxu0 0.0
        %1340 = vmatpush1.xpose.msra.mxu0 0.0
        %1341 = vmatprep.subr.mxu0 0.0
        %1342 = vmatpush1.xpose.msra.mxu0 0.0
        %1343 = vmatprep.subr.mxu0 0.0
        %1344 = vmatpush1.xpose.msra.mxu0 0.0
        %1345 = vmatprep.subr.mxu0 0.0
        %1346 = vmatpush1.xpose.msra.mxu0 0.0
        %1347 = vmatprep.subr.mxu0 0.0
        %1348 = vmatpush1.xpose.msra.mxu0 0.0
        %1349 = vmatprep.subr.mxu0 0.0
        %1350 = vmatpush1.xpose.msra.mxu0 0.0
        %1351 = vmatprep.subr.mxu0 0.0
        %1352 = vmatpush1.xpose.msra.mxu0 0.0
        %1353 = vmatprep.mubr.f32.mxu0 0.0
        %1354 = vmatmul.mubr.f32.gmra.mrb[0].mxu0 %v1283
        %v1355 = vpop.f32.mrb[0].mxu0
        %v1356 = vadd.f32 0.0, %v1355
        %v1357 = vpop.f32.mrb[0].mxu0
        %1358 = vmatprep.mubr.f32.mxu0 0.0
        %1359 = vmatmul.mubr.f32.gmra.mrb[0].mxu0 %v1285
        %v1360 = vpop.f32.mrb[0].mxu0
        %v1361 = vadd.f32 0.0, %v1360
        %v1362 = vpop.f32.mrb[0].mxu0
        %1363 = vdwg.mxu0
        %v1364 = vsel %vm676, %v1356, -inf
        %1365 = vmax.xlane.f32.xlu0 %v1364
        %v1366 = vpop.xlane.xlu0 %1365
        %v1367 = vsel %vm676, %v1361, -inf
        %1368 = vmax.xlane.f32.xlu0 %v1367
        %v1369 = vpop.xlane.xlu0 %1368
        %v1370 = vsub.f32 %v1356, %v1366
        %v1371 = vsub.f32 %v1361, %v1369
        %v1372 = vmul.f32 %v1370, 1.442695
        %v1373 = vpow.pop %v1372
        %v1374 = vmul.f32 %v1371, 1.442695
        %v1375 = vpow.pop %v1374
        %v1376 = vsel %vm676, %v1373, 0.0
        %1377 = vadd.xlane.f32.xlu0 %v1376
        %v1378 = vpop.xlane.xlu0 %1377
        %v1379 = vsel %vm676, %v1375, 0.0
        %1380 = vadd.xlane.f32.xlu0 %v1379
        %v1381 = vpop.xlane.xlu0 %1380
        %v1382 = vrcp.pop %v1378
        %v1383 = vrcp.pop %v1381
        %v1384 = vmul.f32 %v1373, %v1382
        %v1385 = vmul.f32 %v1375, %v1383
        %1386 = vrot.lane.b32.xlu0 %v673, 72
        %v1387 = vpop.permute.xlu0 %1386
        %v1390 = vsel %vm676, %v1384, 0
        %v1393 = vsel %vm676, %v1385, 0
        %1395 = vmatprep.subr.mxu0 0.0
        %1396 = vmatpush1.msra.mxu0 %v1387
        %1397 = vmatprep.subr.mxu0 0.0
        %1398 = vmatpush1.msra.mxu0 0.0
        %1399 = vmatprep.subr.mxu0 0.0
        %1400 = vmatpush1.msra.mxu0 0.0
        %1401 = vmatprep.subr.mxu0 0.0
        %1402 = vmatpush1.msra.mxu0 0.0
        %1403 = vmatprep.subr.mxu0 0.0
        %1404 = vmatpush1.msra.mxu0 0.0
        %1405 = vmatprep.subr.mxu0 0.0
        %1406 = vmatpush1.msra.mxu0 0.0
        %1407 = vmatprep.subr.mxu0 0.0
        %1408 = vmatpush1.msra.mxu0 0.0
        %1409 = vmatprep.subr.mxu0 0.0
        %1410 = vmatpush1.msra.mxu0 0.0
        %1411 = vmatprep.subr.mxu0 0.0
        %1412 = vmatpush1.msra.mxu0 0.0
        %1413 = vmatprep.subr.mxu0 0.0
        %1414 = vmatpush1.msra.mxu0 0.0
        %1415 = vmatprep.subr.mxu0 0.0
        %1416 = vmatpush1.msra.mxu0 0.0
        %1417 = vmatprep.subr.mxu0 0.0
        %1418 = vmatpush1.msra.mxu0 0.0
        %1419 = vmatprep.subr.mxu0 0.0
        %1420 = vmatpush1.msra.mxu0 0.0
        %1421 = vmatprep.subr.mxu0 0.0
        %1422 = vmatpush1.msra.mxu0 0.0
        %1423 = vmatprep.subr.mxu0 0.0
        %1424 = vmatpush1.msra.mxu0 0.0
        %1425 = vmatprep.subr.mxu0 0.0
        %1426 = vmatpush1.msra.mxu0 0.0
        %1427 = vmatprep.subr.mxu0 0.0
        %1428 = vmatpush1.msra.mxu0 0.0
        %1429 = vmatprep.subr.mxu0 0.0
        %1430 = vmatpush1.msra.mxu0 0.0
        %1431 = vmatprep.subr.mxu0 0.0
        %1432 = vmatpush1.msra.mxu0 0.0
        %1433 = vmatprep.subr.mxu0 0.0
        %1434 = vmatpush1.msra.mxu0 0.0
        %1435 = vmatprep.subr.mxu0 0.0
        %1436 = vmatpush1.msra.mxu0 0.0
        %1437 = vmatprep.subr.mxu0 0.0
        %1438 = vmatpush1.msra.mxu0 0.0
        %1439 = vmatprep.subr.mxu0 0.0
        %1440 = vmatpush1.msra.mxu0 0.0
        %1441 = vmatprep.subr.mxu0 0.0
        %1442 = vmatpush1.msra.mxu0 0.0
        %1443 = vmatprep.subr.mxu0 0.0
        %1444 = vmatpush1.msra.mxu0 0.0
        %1445 = vmatprep.subr.mxu0 0.0
        %1446 = vmatpush1.msra.mxu0 0.0
        %1447 = vmatprep.subr.mxu0 0.0
        %1448 = vmatpush1.msra.mxu0 0.0
        %1449 = vmatprep.subr.mxu0 0.0
        %1450 = vmatpush1.msra.mxu0 0.0
        %1451 = vmatprep.subr.mxu0 0.0
        %1452 = vmatpush1.msra.mxu0 0.0
        %1453 = vmatprep.subr.mxu0 0.0
        %1454 = vmatpush1.msra.mxu0 0.0
        %1455 = vmatprep.subr.mxu0 0.0
        %1456 = vmatpush1.msra.mxu0 0.0
        %1457 = vmatprep.subr.mxu0 0.0
        %1458 = vmatpush1.msra.mxu0 0.0
        %1459 = vmatprep.mubr.f32.mxu0 0.0
        %1460 = vmatmul.mubr.f32.gmra.mrb[0].mxu0 %v1390
        %v1461 = vpop.f32.mrb[0].mxu0
        %v1462 = vadd.f32 0.0, %v1461
        %v1463 = vpop.f32.mrb[0].mxu0
        %1464 = vmatprep.mubr.f32.mxu0 0.0
        %1465 = vmatmul.mubr.f32.gmra.mrb[0].mxu0 %v1393
        %v1466 = vpop.f32.mrb[0].mxu0
        %v1467 = vadd.f32 0.0, %v1466
        %v1468 = vpop.f32.mrb[0].mxu0
        %1469 = vdwg.mxu0
        %1472 = vrot.lane.b32.xlu0 %v1462, 24
        %v1473 = vpop.permute.xlu0 %1472
        %1474 = vrot.lane.b32.xlu0 %v1467, 24
        %v1475 = vpop.permute.xlu0 %1474
        %vm1478 = vcmask 261312
        %1479 = vst.msk [vmem:[#allocation2] sm:$0xff] %vm1478, %v1473
        %1480 = vst.msk [vmem:[#allocation2 + $0x8] sm:$0xff] %vm1478, %v1475
        %v1481 = vld [vmem:[#allocation2] sm:$0xff]
        %v1482 = vld [vmem:[#allocation2 + $0x8] sm:$0xff]
        %v1483 = vld [vmem:[%s5] sm:$0xff]
        %v1484 = vld [vmem:[%s5 + $0x8] sm:$0xff]
        %v1485 = vld [vmem:[%s5 + $0x10] sm:$0xff]
        %v1486 = vld [vmem:[%s5 + $0x18] sm:$0xff]
        %v1487 = vld [vmem:[%s6] sm:$0x1]
        %v1489 = vlaneseq
        %v1490 = vshrl.u32 %v1489, 7
        %v1491 = vsub.s32 0, %v1490
        %v1492 = vrot.slane %v1487, %v1491
        %v1495 = vsel %vm510, %v1481, 0
        %v1498 = vsel %vm510, %v1482, 0
        %1500 = vmatprep.subr.mxu0 0.0
        %1501 = vmatpush1.msra.mxu0 %v1483
        %1502 = vmatprep.subr.mxu0 0.0
        %1503 = vmatpush1.msra.mxu0 %v1484
        %1504 = vmatprep.subr.mxu0 0.0
        %1505 = vmatpush1.msra.mxu0 %v1485
        %1506 = vmatprep.subr.mxu0 0.0
        %1507 = vmatpush1.msra.mxu0 %v1486
        %1508 = vmatprep.subr.mxu0 0.0
        %1509 = vmatpush1.msra.mxu0 0.0
        %1510 = vmatprep.subr.mxu0 0.0
        %1511 = vmatpush1.msra.mxu0 0.0
        %1512 = vmatprep.subr.mxu0 0.0
        %1513 = vmatpush1.msra.mxu0 0.0
        %1514 = vmatprep.subr.mxu0 0.0
        %1515 = vmatpush1.msra.mxu0 0.0
        %1516 = vmatprep.subr.mxu0 0.0
        %1517 = vmatpush1.msra.mxu0 0.0
        %1518 = vmatprep.subr.mxu0 0.0
        %1519 = vmatpush1.msra.mxu0 0.0
        %1520 = vmatprep.subr.mxu0 0.0
        %1521 = vmatpush1.msra.mxu0 0.0
        %1522 = vmatprep.subr.mxu0 0.0
        %1523 = vmatpush1.msra.mxu0 0.0
        %1524 = vmatprep.subr.mxu0 0.0
        %1525 = vmatpush1.msra.mxu0 0.0
        %1526 = vmatprep.subr.mxu0 0.0
        %1527 = vmatpush1.msra.mxu0 0.0
        %1528 = vmatprep.subr.mxu0 0.0
        %1529 = vmatpush1.msra.mxu0 0.0
        %1530 = vmatprep.subr.mxu0 0.0
        %1531 = vmatpush1.msra.mxu0 0.0
        %1532 = vmatprep.subr.mxu0 0.0
        %1533 = vmatpush1.msra.mxu0 0.0
        %1534 = vmatprep.subr.mxu0 0.0
        %1535 = vmatpush1.msra.mxu0 0.0
        %1536 = vmatprep.subr.mxu0 0.0
        %1537 = vmatpush1.msra.mxu0 0.0
        %1538 = vmatprep.subr.mxu0 0.0
        %1539 = vmatpush1.msra.mxu0 0.0
        %1540 = vmatprep.subr.mxu0 0.0
        %1541 = vmatpush1.msra.mxu0 0.0
        %1542 = vmatprep.subr.mxu0 0.0
        %1543 = vmatpush1.msra.mxu0 0.0
        %1544 = vmatprep.subr.mxu0 0.0
        %1545 = vmatpush1.msra.mxu0 0.0
        %1546 = vmatprep.subr.mxu0 0.0
        %1547 = vmatpush1.msra.mxu0 0.0
        %1548 = vmatprep.subr.mxu0 0.0
        %1549 = vmatpush1.msra.mxu0 0.0
        %1550 = vmatprep.subr.mxu0 0.0
        %1551 = vmatpush1.msra.mxu0 0.0
        %1552 = vmatprep.subr.mxu0 0.0
        %1553 = vmatpush1.msra.mxu0 0.0
        %1554 = vmatprep.subr.mxu0 0.0
        %1555 = vmatpush1.msra.mxu0 0.0
        %1556 = vmatprep.subr.mxu0 0.0
        %1557 = vmatpush1.msra.mxu0 0.0
        %1558 = vmatprep.subr.mxu0 0.0
        %1559 = vmatpush1.msra.mxu0 0.0
        %1560 = vmatprep.subr.mxu0 0.0
        %1561 = vmatpush1.msra.mxu0 0.0
        %1562 = vmatprep.subr.mxu0 0.0
        %1563 = vmatpush1.msra.mxu0 0.0
        %1564 = vmatprep.mubr.f32.mxu0 0.0
        %1565 = vmatmul.mubr.f32.gmra.mrb[0].mxu0 %v1495
        %v1566 = vpop.f32.mrb[0].mxu0
        %v1567 = vadd.f32 %v1492, %v1566
        %v1568 = vpop.f32.mrb[0].mxu0
        %1569 = vmatprep.mubr.f32.mxu0 0.0
        %1570 = vmatmul.mubr.f32.gmra.mrb[0].mxu0 %v1498
        %v1571 = vpop.f32.mrb[0].mxu0
        %v1572 = vadd.f32 %v1492, %v1571
        %v1573 = vpop.f32.mrb[0].mxu0
        %1574 = vdwg.mxu0
        %v1575 = vadd.f32 %v496, %v1567
        %v1576 = vadd.f32 %v497, %v1572
        %v1577 = vld [vmem:[%s7] sm:$0x1]
        %v1578 = vld [vmem:[%s8] sm:$0x1]
        %v1579 = vsel %vm510, %v1575, 0.0
        %1580 = vadd.xlane.f32.xlu0 %v1579
        %v1581 = vpop.xlane.xlu0 %1580
        %v1582 = vsel %vm510, %v1576, 0.0
        %1583 = vadd.xlane.f32.xlu0 %v1582
        %v1584 = vpop.xlane.xlu0 %1583
        %v1585 = vrcp.pop 32.0
        %v1586 = vmul.f32 %v1581, %v1585
        %v1587 = vmul.f32 %v1584, %v1585
        %v1588 = vsub.f32 %v1575, %v1586
        %v1589 = vsub.f32 %v1576, %v1587
        %v1590 = vmul.f32 %v1588, %v1588
        %v1591 = vmul.f32 %v1589, %v1589
        %v1592 = vsel %vm510, %v1590, 0.0
        %1593 = vadd.xlane.f32.xlu0 %v1592
        %v1594 = vpop.xlane.xlu0 %1593
        %v1595 = vsel %vm510, %v1591, 0.0
        %1596 = vadd.xlane.f32.xlu0 %v1595
        %v1597 = vpop.xlane.xlu0 %1596
        %v1598 = vmul.f32 %v1594, %v1585
        %v1599 = vmul.f32 %v1597, %v1585
        %v1600 = vadd.f32 %v1598, 1e-05
        %v1601 = vadd.f32 %v1599, 1e-05
        %v1602 = vrsqrt.pop %v1600
        %v1603 = vrsqrt.pop %v1601
        %v1604 = vmul.f32 %v1588, %v1602
        %v1605 = vmul.f32 %v1589, %v1603
        %v1607 = vlaneseq
        %v1608 = vshrl.u32 %v1607, 7
        %v1609 = vsub.s32 0, %v1608
        %v1610 = vrot.slane %v1577, %v1609
        %v1612 = vmul.f32 %v1604, %v1610
        %v1613 = vmul.f32 %v1605, %v1610
        %v1615 = vlaneseq
        %v1616 = vshrl.u32 %v1615, 7
        %v1617 = vsub.s32 0, %v1616
        %v1618 = vrot.slane %v1578, %v1617
        %v1620 = vadd.f32 %v1612, %v1618
        %v1621 = vadd.f32 %v1613, %v1618
        %v1622 = vld [vmem:[%s9] sm:$0xff]
        %v1623 = vld [vmem:[%s9 + $0x8] sm:$0xff]
        %v1624 = vld [vmem:[%s9 + $0x10] sm:$0xff]
        %v1625 = vld [vmem:[%s9 + $0x18] sm:$0xff]
        %v1626 = vld [vmem:[%s10] sm:$0x1]
        %v1628 = vlaneseq
        %v1629 = vshrl.u32 %v1628, 7
        %v1630 = vsub.s32 0, %v1629
        %v1631 = vrot.slane %v1626, %v1630
        %v1634 = vsel %vm510, %v1620, 0
        %v1637 = vsel %vm510, %v1621, 0
        %1639 = vmatprep.subr.mxu0 0.0
        %1640 = vmatpush1.msra.mxu0 %v1622
        %1641 = vmatprep.subr.mxu0 0.0
        %1642 = vmatpush1.msra.mxu0 %v1623
        %1643 = vmatprep.subr.mxu0 0.0
        %1644 = vmatpush1.msra.mxu0 %v1624
        %1645 = vmatprep.subr.mxu0 0.0
        %1646 = vmatpush1.msra.mxu0 %v1625
        %1647 = vmatprep.subr.mxu0 0.0
        %1648 = vmatpush1.msra.mxu0 0.0
        %1649 = vmatprep.subr.mxu0 0.0
        %1650 = vmatpush1.msra.mxu0 0.0
        %1651 = vmatprep.subr.mxu0 0.0
        %1652 = vmatpush1.msra.mxu0 0.0
        %1653 = vmatprep.subr.mxu0 0.0
        %1654 = vmatpush1.msra.mxu0 0.0
        %1655 = vmatprep.subr.mxu0 0.0
        %1656 = vmatpush1.msra.mxu0 0.0
        %1657 = vmatprep.subr.mxu0 0.0
        %1658 = vmatpush1.msra.mxu0 0.0
        %1659 = vmatprep.subr.mxu0 0.0
        %1660 = vmatpush1.msra.mxu0 0.0
        %1661 = vmatprep.subr.mxu0 0.0
        %1662 = vmatpush1.msra.mxu0 0.0
        %1663 = vmatprep.subr.mxu0 0.0
        %1664 = vmatpush1.msra.mxu0 0.0
        %1665 = vmatprep.subr.mxu0 0.0
        %1666 = vmatpush1.msra.mxu0 0.0
        %1667 = vmatprep.subr.mxu0 0.0
        %1668 = vmatpush1.msra.mxu0 0.0
        %1669 = vmatprep.subr.mxu0 0.0
        %1670 = vmatpush1.msra.mxu0 0.0
        %1671 = vmatprep.subr.mxu0 0.0
        %1672 = vmatpush1.msra.mxu0 0.0
        %1673 = vmatprep.subr.mxu0 0.0
        %1674 = vmatpush1.msra.mxu0 0.0
        %1675 = vmatprep.subr.mxu0 0.0
        %1676 = vmatpush1.msra.mxu0 0.0
        %1677 = vmatprep.subr.mxu0 0.0
        %1678 = vmatpush1.msra.mxu0 0.0
        %1679 = vmatprep.subr.mxu0 0.0
        %1680 = vmatpush1.msra.mxu0 0.0
        %1681 = vmatprep.subr.mxu0 0.0
        %1682 = vmatpush1.msra.mxu0 0.0
        %1683 = vmatprep.subr.mxu0 0.0
        %1684 = vmatpush1.msra.mxu0 0.0
        %1685 = vmatprep.subr.mxu0 0.0
        %1686 = vmatpush1.msra.mxu0 0.0
        %1687 = vmatprep.subr.mxu0 0.0
        %1688 = vmatpush1.msra.mxu0 0.0
        %1689 = vmatprep.subr.mxu0 0.0
        %1690 = vmatpush1.msra.mxu0 0.0
        %1691 = vmatprep.subr.mxu0 0.0
        %1692 = vmatpush1.msra.mxu0 0.0
        %1693 = vmatprep.subr.mxu0 0.0
        %1694 = vmatpush1.msra.mxu0 0.0
        %1695 = vmatprep.subr.mxu0 0.0
        %1696 = vmatpush1.msra.mxu0 0.0
        %1697 = vmatprep.subr.mxu0 0.0
        %1698 = vmatpush1.msra.mxu0 0.0
        %1699 = vmatprep.subr.mxu0 0.0
        %1700 = vmatpush1.msra.mxu0 0.0
        %1701 = vmatprep.subr.mxu0 0.0
        %1702 = vmatpush1.msra.mxu0 0.0
        %1703 = vmatprep.mubr.f32.mxu0 0.0
        %1704 = vmatmul.mubr.f32.gmra.mrb[0].mxu0 %v1634
        %v1705 = vpop.f32.mrb[0].mxu0
        %v1706 = vadd.f32 %v1631, %v1705
        %v1707 = vpop.f32.mrb[0].mxu0
        %1708 = vmatprep.mubr.f32.mxu0 0.0
        %1709 = vmatmul.mubr.f32.gmra.mrb[0].mxu0 %v1637
        %v1710 = vpop.f32.mrb[0].mxu0
        %v1711 = vadd.f32 %v1631, %v1710
        %v1712 = vpop.f32.mrb[0].mxu0
        %1713 = vdwg.mxu0
        %v1714 = vmax.f32 %v1706, 0.0
        %v1715 = vmax.f32 %v1711, 0.0
        %v1716 = vld [vmem:[%s11] sm:$0xff]
        %v1717 = vld [vmem:[%s11 + $0x8] sm:$0xff]
        %v1718 = vld [vmem:[%s11 + $0x10] sm:$0xff]
        %v1719 = vld [vmem:[%s11 + $0x18] sm:$0xff]
        %v1720 = vld [vmem:[%s11 + $0x20] sm:$0xff]
        %v1721 = vld [vmem:[%s11 + $0x28] sm:$0xff]
        %v1722 = vld [vmem:[%s11 + $0x30] sm:$0xff]
        %v1723 = vld [vmem:[%s11 + $0x38] sm:$0xff]
        %v1724 = vld [vmem:[%s11 + $0x40] sm:$0xff]
        %v1725 = vld [vmem:[%s11 + $0x48] sm:$0xff]
        %v1726 = vld [vmem:[%s11 + $0x50] sm:$0xff]
        %v1727 = vld [vmem:[%s11 + $0x58] sm:$0xff]
        %v1728 = vld [vmem:[%s11 + $0x60] sm:$0xff]
        %v1729 = vld [vmem:[%s11 + $0x68] sm:$0xff]
        %v1730 = vld [vmem:[%s11 + $0x70] sm:$0xff]
        %v1731 = vld [vmem:[%s11 + $0x78] sm:$0xff]
        %v1732 = vld [vmem:[%s12] sm:$0x1]
        %v1734 = vlaneseq
        %v1735 = vshrl.u32 %v1734, 7
        %v1736 = vsub.s32 0, %v1735
        %v1737 = vrot.slane %v1732, %v1736
        %1739 = vmatprep.subr.mxu0 0.0
        %1740 = vmatpush1.msra.mxu0 %v1716
        %1741 = vmatprep.subr.mxu0 0.0
        %1742 = vmatpush1.msra.mxu0 %v1717
        %1743 = vmatprep.subr.mxu0 0.0
        %1744 = vmatpush1.msra.mxu0 %v1718
        %1745 = vmatprep.subr.mxu0 0.0
        %1746 = vmatpush1.msra.mxu0 %v1719
        %1747 = vmatprep.subr.mxu0 0.0
        %1748 = vmatpush1.msra.mxu0 %v1720
        %1749 = vmatprep.subr.mxu0 0.0
        %1750 = vmatpush1.msra.mxu0 %v1721
        %1751 = vmatprep.subr.mxu0 0.0
        %1752 = vmatpush1.msra.mxu0 %v1722
        %1753 = vmatprep.subr.mxu0 0.0
        %1754 = vmatpush1.msra.mxu0 %v1723
        %1755 = vmatprep.subr.mxu0 0.0
        %1756 = vmatpush1.msra.mxu0 %v1724
        %1757 = vmatprep.subr.mxu0 0.0
        %1758 = vmatpush1.msra.mxu0 %v1725
        %1759 = vmatprep.subr.mxu0 0.0
        %1760 = vmatpush1.msra.mxu0 %v1726
        %1761 = vmatprep.subr.mxu0 0.0
        %1762 = vmatpush1.msra.mxu0 %v1727
        %1763 = vmatprep.subr.mxu0 0.0
        %1764 = vmatpush1.msra.mxu0 %v1728
        %1765 = vmatprep.subr.mxu0 0.0
        %1766 = vmatpush1.msra.mxu0 %v1729
        %1767 = vmatprep.subr.mxu0 0.0
        %1768 = vmatpush1.msra.mxu0 %v1730
        %1769 = vmatprep.subr.mxu0 0.0
        %1770 = vmatpush1.msra.mxu0 %v1731
        %1771 = vmatprep.subr.mxu0 0.0
        %1772 = vmatpush1.msra.mxu0 0.0
        %1773 = vmatprep.subr.mxu0 0.0
        %1774 = vmatpush1.msra.mxu0 0.0
        %1775 = vmatprep.subr.mxu0 0.0
        %1776 = vmatpush1.msra.mxu0 0.0
        %1777 = vmatprep.subr.mxu0 0.0
        %1778 = vmatpush1.msra.mxu0 0.0
        %1779 = vmatprep.subr.mxu0 0.0
        %1780 = vmatpush1.msra.mxu0 0.0
        %1781 = vmatprep.subr.mxu0 0.0
        %1782 = vmatpush1.msra.mxu0 0.0
        %1783 = vmatprep.subr.mxu0 0.0
        %1784 = vmatpush1.msra.mxu0 0.0
        %1785 = vmatprep.subr.mxu0 0.0
        %1786 = vmatpush1.msra.mxu0 0.0
        %1787 = vmatprep.subr.mxu0 0.0
        %1788 = vmatpush1.msra.mxu0 0.0
        %1789 = vmatprep.subr.mxu0 0.0
        %1790 = vmatpush1.msra.mxu0 0.0
        %1791 = vmatprep.subr.mxu0 0.0
        %1792 = vmatpush1.msra.mxu0 0.0
        %1793 = vmatprep.subr.mxu0 0.0
        %1794 = vmatpush1.msra.mxu0 0.0
        %1795 = vmatprep.subr.mxu0 0.0
        %1796 = vmatpush1.msra.mxu0 0.0
        %1797 = vmatprep.subr.mxu0 0.0
        %1798 = vmatpush1.msra.mxu0 0.0
        %1799 = vmatprep.subr.mxu0 0.0
        %1800 = vmatpush1.msra.mxu0 0.0
        %1801 = vmatprep.subr.mxu0 0.0
        %1802 = vmatpush1.msra.mxu0 0.0
        %1803 = vmatprep.mubr.f32.mxu0 0.0
        %1804 = vmatmul.mubr.f32.gmra.mrb[0].mxu0 %v1714
        %v1805 = vpop.f32.mrb[0].mxu0
        %v1806 = vadd.f32 %v1737, %v1805
        %v1807 = vpop.f32.mrb[0].mxu0
        %1808 = vmatprep.mubr.f32.mxu0 0.0
        %1809 = vmatmul.mubr.f32.gmra.mrb[0].mxu0 %v1715
        %v1810 = vpop.f32.mrb[0].mxu0
        %v1811 = vadd.f32 %v1737, %v1810
        %v1812 = vpop.f32.mrb[0].mxu0
        %1813 = vdwg.mxu0
        %v1814 = vadd.f32 %v1620, %v1806
        %v1815 = vadd.f32 %v1621, %v1811
        %v1816 = vld [vmem:[%s13] sm:$0x1]
        %v1817 = vld [vmem:[%s14] sm:$0x1]
        %v1818 = vsel %vm510, %v1814, 0.0
        %1819 = vadd.xlane.f32.xlu0 %v1818
        %v1820 = vpop.xlane.xlu0 %1819
        %v1821 = vsel %vm510, %v1815, 0.0
        %1822 = vadd.xlane.f32.xlu0 %v1821
        %v1823 = vpop.xlane.xlu0 %1822
        %v1824 = vmul.f32 %v1820, %v1585
        %v1825 = vmul.f32 %v1823, %v1585
        %v1826 = vsub.f32 %v1814, %v1824
        %v1827 = vsub.f32 %v1815, %v1825
        %v1828 = vmul.f32 %v1826, %v1826
        %v1829 = vmul.f32 %v1827, %v1827
        %v1830 = vsel %vm510, %v1828, 0.0
        %1831 = vadd.xlane.f32.xlu0 %v1830
        %v1832 = vpop.xlane.xlu0 %1831
        %v1833 = vsel %vm510, %v1829, 0.0
        %1834 = vadd.xlane.f32.xlu0 %v1833
        %v1835 = vpop.xlane.xlu0 %1834
        %v1836 = vmul.f32 %v1832, %v1585
        %v1837 = vmul.f32 %v1835, %v1585
        %v1838 = vadd.f32 %v1836, 1e-05
        %v1839 = vadd.f32 %v1837, 1e-05
        %v1840 = vrsqrt.pop %v1838
        %v1841 = vrsqrt.pop %v1839
        %v1842 = vmul.f32 %v1826, %v1840
        %v1843 = vmul.f32 %v1827, %v1841
        %v1845 = vlaneseq
        %v1846 = vshrl.u32 %v1845, 7
        %v1847 = vsub.s32 0, %v1846
        %v1848 = vrot.slane %v1816, %v1847
        %v1850 = vmul.f32 %v1842, %v1848
        %v1851 = vmul.f32 %v1843, %v1848
        %v1853 = vlaneseq
        %v1854 = vshrl.u32 %v1853, 7
        %v1855 = vsub.s32 0, %v1854
        %v1856 = vrot.slane %v1817, %v1855
        %v1858 = vadd.f32 %v1850, %v1856
        %v1859 = vadd.f32 %v1851, %v1856
        %1860 = vst.msk [vmem:[%s488] sm:$0xff] %vm510, %v1858
        %1861 = vst.msk [vmem:[%s488 + $0x8] sm:$0xff] %vm510, %v1859
        %s1862 = sand.u32 %s357, 1
        %s1863 = scalar_lea.sflag [#allocation4], %s1862
        %s1864 = sand.u32 %s357, 1
        %s1865 = smul.addr %s1864, 16
        %s1866 = scalar_lea.vmem [#allocation3], %s1865
        // Predicated region
        $region81: #{tpu_custom_call.1} parent=79 // pred_check
          %p1867 = pneg %p367
        $region82: #{tpu_custom_call.1} parent=79 // pred_check_branch
          %1869 = sbr.rel (%p1867) target = $region84
        $region83: #{tpu_custom_call.1} parent=79 // pred_region
          %s1870 = smul.u32 2, %s29
          %s1872 = ssub.s32 256, 256
          %1873 = vsyncadd %s1863, %s1872
          %s1874 = smul.addr %s1870, 128
          %s1875 = scalar_lea.hbm %s15, %s1874
          %s1876 = sshll.u32 %s1866, 4
          %s1877 = int_to_ptr.vmem [resolvable:$true] %s1876
          %1882 = dma.vmem_to_hbm [thread:$0]  %s1877, 256, %s1875, %s1863, 128, 128, 8
        $region84: #{tpu_custom_call.1} parent=79 // pred_fallthru
          _
      $region80: #{tpu_custom_call.1} parent=5 // pred_fallthru
        _
      %p1883 = scmp.le.s32.totalorder 2, %s24
      // Predicated region
      $region85: #{tpu_custom_call.1} parent=5 // pred_check
        %p1884 = pneg %p1883
      $region86: #{tpu_custom_call.1} parent=5 // pred_check_branch
        %1886 = sbr.rel (%p1884) target = $region88
      $region87: #{tpu_custom_call.1} parent=5 // pred_region
        %s1887 = ssub.s32 %s24, 2
        // Predicated region
        $region89: #{tpu_custom_call.1} parent=87 // pred_check
          %p1888 = pneg %p373
        $region90: #{tpu_custom_call.1} parent=87 // pred_check_branch
          %1890 = sbr.rel (%p1888) target = $region92
        $region91: #{tpu_custom_call.1} parent=87 // pred_region
          %s1891 = sand.u32 %s358, 1
          %s1892 = scalar_lea.sflag [#allocation4], %s1891
          %s1893 = sand.u32 %s358, 1
          %s1894 = smul.addr %s1893, 16
          %s1895 = scalar_lea.vmem [#allocation3], %s1894
          %1896 = dma.done %s1892, 256
        $region92: #{tpu_custom_call.1} parent=87 // pred_fallthru
          _
      $region88: #{tpu_custom_call.1} parent=5 // pred_fallthru
        _
    $region6: #{tpu_custom_call.1} parent=1 // loop_footer
      %s28 = sadd.s32 1, %s24
    $region7: #{tpu_custom_call.1} parent=1 // loop_footer_branch
      %23 = sbr.rel target = $region3
    $region8: #{tpu_custom_call.1} parent=1 // loop_exit
      _
    %1897 = vsyncpa [#allocation4], 1
    %s1898 = scalar_lea.sflag [#allocation4], 1
    %1899 = vsyncpa %s1898, 1

</llo_original>
